<compile_context>
chip_gen: v5e
topology: v5e:2x2
jax: 0.10.0
libtpu: 0.0.40
codegen_flags: <defaults>
</compile_context>

<pallas_src>
import math

import jax
import jax.numpy as jnp
from jax.experimental import pallas as pl
from jax.experimental.pallas import tpu as pltpu


# ----------------------------------------------------------------------------
# Problem configuration (deterministic, in-script — mirrors module __init__).
# ----------------------------------------------------------------------------
WALL_WIDTH = 4                        # sqrt(wallSize)
WALL_SIZE = WALL_WIDTH * WALL_WIDTH   # patches per wall
NUM_PATCHES = 13 * WALL_SIZE          # wallSize = numPatches / 13
N_FEATURES = 3 * NUM_PATCHES          # RGB per patch (= 624)
NUM_BOUNCES = 3
NUM_DIVIDES = 4                       # stand-in for args.num_divides
BATCH = 2
LANE = 128


def make_params():
    """Deterministic ffGrid / bias / colours, matching the module's __init__."""
    key = jax.random.PRNGKey(0)
    k_w, k_c = jax.random.split(key)

    # ffGrid -> fc.weight, shape (N, N)
    w = jax.random.uniform(k_w, (N_FEATURES, N_FEATURES), dtype=jnp.float32,
                           minval=0.0, maxval=0.01)

    # bias: zeros except 6 light patches x 3 colour channels.
    light_corner = int(math.floor(WALL_SIZE + WALL_SIZE / 2 - WALL_WIDTH))
    size_ratio = float(NUM_DIVIDES) / 10.0
    light_intensity = 15.0 * size_ratio * size_ratio

    bias = jnp.zeros((N_FEATURES,), dtype=jnp.float32)
    patch_offsets = [-1, 0, 1, WALL_WIDTH - 1, WALL_WIDTH, WALL_WIDTH + 1]
    idx = []
    for off in patch_offsets:
        base = 3 * (light_corner + off)
        idx.extend([base, base + 1, base + 2])
    bias = bias.at[jnp.array(idx)].set(light_intensity)

    # colours: per-feature multiplier (broadcasts over batch like torch's `*`).
    colours = jax.random.uniform(k_c, (N_FEATURES,), dtype=jnp.float32,
                                 minval=0.2, maxval=1.0)
    return w, bias, colours


def prep_params(w, bias, colours):
    """One-time, amortized parameter prep.

    1. Fold `colours` into the weight and bias:
         colours * (x @ W.T + bias) == x @ (diag(colours) @ W).T + colours*bias
    2. Pre-transpose the folded weight so the kernel runs a native NN matmul.
    3. Zero-pad the feature dim to a multiple of 128 (lane-dense MXU tiles).
       Padding is exact: padded weight rows/cols and bias lanes are zero, so
       padded activation lanes stay identically zero across every bounce.

    Returns (w_t, b_eff) with shapes (N_pad, N_pad) and (1, N_pad).
    """
    n = w.shape[0]
    w_eff = colours[:, None] * w              # diag(colours) @ W
    b_eff = colours * bias
    w_t = w_eff.T                             # kernel computes x @ w_t

    n_pad = ((n + LANE - 1) // LANE) * LANE
    p = n_pad - n
    if p:
        w_t = jnp.pad(w_t, ((0, p), (0, p)))
        b_eff = jnp.pad(b_eff, (0, p))
    return w_t, b_eff.reshape(1, n_pad)


# ----------------------------------------------------------------------------
# Pallas kernel: the full bounce loop runs on-chip. Each bounce is one MXU
# matmul against the pre-transposed, colour-folded weight plus a VPU bias add.
# ----------------------------------------------------------------------------
def ffnet_kernel(x_ref, w_ref, b_ref, o_ref):
    n_in = x_ref.shape[-1]                    # 624: un-padded feature width
    b = b_ref[...]                            # (1, Np)
    # Bounce 1: contract the un-padded activations against the first n_in rows
    # of the padded weight (pad rows are zero -> exact). n_in is a multiple of
    # 8, so this is a sublane-aligned static ref slice; the result is a
    # lane-dense (TB, Np) block, so later bounces run full 128-multiple K.
    x = jnp.dot(x_ref[...], w_ref[:n_in, :],
                preferred_element_type=jnp.float32) + b
    for _ in range(NUM_BOUNCES - 1):          # static trip count, unrolled
        x = jnp.dot(x, w_ref[...], preferred_element_type=jnp.float32) + b
    # Write back only the real features: one masked partial store on the last
    # lane group instead of a separate HBM slice pass in the wrapper.
    o_ref[...] = x[:, :n_in].astype(o_ref.dtype)


def pick_batch_tile():
    """Generation-aware default batch tile.

    v7x : 2 TensorCores/chip -> small tiles so each core gets >= 2 blocks and
          can pipeline the x DMA / writeback under compute.
    v6e : 1 TensorCore, 32 MiB scoped VMEM -> larger tiles amortize the
          ~0.35 us per-grid-step overhead.
    v5e : 16 MiB default scoped VMEM -> keep tiles modest.
    """
    try:
        kind = jax.devices()[0].device_kind.lower()
    except Exception:
        return 256
    if "v7" in kind or "7x" in kind:
        return 128
    if "v6" in kind:
        return 512
    return 256


def ffnet_forward(x, w_t, b_eff, *, batch_tile=None):
    """x: (B, N_FEATURES) f32; w_t/b_eff from prep_params. Returns (B, N_FEATURES)."""
    B, n_in = x.shape
    n_pad = w_t.shape[0]
    if batch_tile is None:
        batch_tile = pick_batch_tile()

    cost = pl.CostEstimate(
        flops=2 * NUM_BOUNCES * B * n_pad * n_pad,
        bytes_accessed=4 * (n_pad * n_pad + 2 * B * n_in + n_pad),
        transcendentals=0)

    if B > batch_tile:
        # Batch-tiled path: batch on a "parallel" grid axis (sharded across
        # v7x's two TensorCores).  Weight / bias BlockSpecs return a constant
        # block index so they are fetched once and stay VMEM-resident across
        # all batch tiles.  A partial last tile (B not a multiple of the tile)
        # is masked by Pallas on writeback; rows are independent, so exact.
        out = pl.pallas_call(
            ffnet_kernel,
            out_shape=jax.ShapeDtypeStruct((B, n_in), jnp.float32),
            grid=(pl.cdiv(B, batch_tile),),
            in_specs=[
                pl.BlockSpec((batch_tile, n_in), lambda i: (i, 0)),
                pl.BlockSpec((n_pad, n_pad), lambda i: (0, 0)),
                pl.BlockSpec((1, n_pad), lambda i: (0, 0)),
            ],
            out_specs=pl.BlockSpec((batch_tile, n_in), lambda i: (i, 0)),
            compiler_params=pltpu.CompilerParams(
                dimension_semantics=("parallel",)),
            cost_estimate=cost,
        )(x, w_t, b_eff)
    else:
        # Small-batch path: grid-less launch, whole arrays VMEM-resident
        # (~1.6 MiB weight + a few hundred KiB of activations).  No pipeline
        # machinery, no second double-buffer copy of anything.
        vmem = pl.BlockSpec(memory_space=pltpu.MemorySpace.VMEM)
        out = pl.pallas_call(
            ffnet_kernel,
            out_shape=jax.ShapeDtypeStruct((B, n_in), jnp.float32),
            in_specs=[vmem, vmem, vmem],
            out_specs=vmem,
            cost_estimate=cost,
        )(x, w_t, b_eff)
    return out


def ffnet_reference(x, w, bias, colours):
    for _ in range(NUM_BOUNCES):
        x = colours * (x @ w.T + bias)
    return x


if __name__ == "__main__":
    w, bias, colours = make_params()
    w_t, b_eff = prep_params(w, bias, colours)    # one-time amortized prep

    # Small batch (module-like usage, B=2): grid-less VMEM-resident path.
    x = jax.random.uniform(jax.random.PRNGKey(42), (BATCH, N_FEATURES),
                           dtype=jnp.float32)
    out = jax.block_until_ready(ffnet_forward(x, w_t, b_eff))
    ref = ffnet_reference(x, w, bias, colours)
    assert out.shape == (BATCH, N_FEATURES)
    # Tolerance: colour-folding changes rounding order (scale-before-sum), so
    # allow a small margin over the un-folded f32 reference.
    assert jnp.allclose(out, ref, rtol=2e-4, atol=2e-4), "small-batch mismatch"

    # Larger batch with the generation-aware default tile.
    xb = jax.random.uniform(jax.random.PRNGKey(7), (512, N_FEATURES),
                            dtype=jnp.float32)
    ref_b = ffnet_reference(xb, w, bias, colours)
    out_b = jax.block_until_ready(ffnet_forward(xb, w_t, b_eff))
    assert out_b.shape == (512, N_FEATURES)
    assert jnp.allclose(out_b, ref_b, rtol=2e-4, atol=2e-4), "batched mismatch"

    # Explicitly exercise the batch-tiled "parallel" grid path on every
    # generation (4 batch tiles, weight resident across them).
    out_t = jax.block_until_ready(ffnet_forward(xb, w_t, b_eff, batch_tile=128))
    assert jnp.allclose(out_t, ref_b, rtol=2e-4, atol=2e-4), "tiled-path mismatch"

    print("KERNEL_OK")
</pallas_src>

<mosaic_0001>
module attributes {stable_mosaic.version = 11 : i64} {
  func.func @ffnet_kernel(%arg0: memref<2x624xf32, #tpu.memory_space<vmem>>, %arg1: memref<640x640xf32, #tpu.memory_space<vmem>>, %arg2: memref<1x640xf32, #tpu.memory_space<vmem>>, %arg3: memref<2x624xf32, #tpu.memory_space<vmem>>) attributes {dimension_semantics = [], scalar_prefetch = 0 : i64, scratch_operands = 0 : i64, tpu.core_type = #tpu.core_type<tc>} {
    %c0 = arith.constant 0 : index
    %c0_0 = arith.constant 0 : index
    %0 = vector.load %arg2[%c0, %c0_0] : memref<1x640xf32, #tpu.memory_space<vmem>>, vector<1x640xf32>
    %c0_1 = arith.constant 0 : index
    %c0_2 = arith.constant 0 : index
    %1 = vector.load %arg0[%c0_1, %c0_2] : memref<2x624xf32, #tpu.memory_space<vmem>>, vector<2x624xf32>
    %c0_3 = arith.constant 0 : index
    %c0_4 = arith.constant 0 : index
    %2 = vector.load %arg1[%c0_3, %c0_4] : memref<640x640xf32, #tpu.memory_space<vmem>>, vector<624x640xf32>
    %cst = arith.constant dense<0.000000e+00> : vector<2x640xf32>
    %3 = tpu.matmul %1, %2, %cst {dimension_numbers = #tpu.dot_dimension_numbers<[1], [0], [0], [1], [0, 0, 1, 1], [], []>} : vector<2x624xf32>, vector<624x640xf32>, vector<2x640xf32> -> vector<2x640xf32>
    %4 = vector.broadcast %0 : vector<1x640xf32> to vector<2x640xf32>
    %5 = arith.addf %3, %4 : vector<2x640xf32>
    %c0_5 = arith.constant 0 : index
    %c0_6 = arith.constant 0 : index
    %6 = vector.load %arg1[%c0_5, %c0_6] : memref<640x640xf32, #tpu.memory_space<vmem>>, vector<640x640xf32>
    %cst_7 = arith.constant dense<0.000000e+00> : vector<2x640xf32>
    %7 = tpu.matmul %5, %6, %cst_7 {dimension_numbers = #tpu.dot_dimension_numbers<[1], [0], [0], [1], [0, 0, 1, 1], [], []>} : vector<2x640xf32>, vector<640x640xf32>, vector<2x640xf32> -> vector<2x640xf32>
    %8 = vector.broadcast %0 : vector<1x640xf32> to vector<2x640xf32>
    %9 = arith.addf %7, %8 : vector<2x640xf32>
    %c0_8 = arith.constant 0 : index
    %c0_9 = arith.constant 0 : index
    %10 = vector.load %arg1[%c0_8, %c0_9] : memref<640x640xf32, #tpu.memory_space<vmem>>, vector<640x640xf32>
    %cst_10 = arith.constant dense<0.000000e+00> : vector<2x640xf32>
    %11 = tpu.matmul %9, %10, %cst_10 {dimension_numbers = #tpu.dot_dimension_numbers<[1], [0], [0], [1], [0, 0, 1, 1], [], []>} : vector<2x640xf32>, vector<640x640xf32>, vector<2x640xf32> -> vector<2x640xf32>
    %12 = vector.broadcast %0 : vector<1x640xf32> to vector<2x640xf32>
    %13 = arith.addf %11, %12 : vector<2x640xf32>
    %14 = vector.extract_strided_slice %13 {offsets = [0, 0], sizes = [2, 624], strides = [1, 1]} : vector<2x640xf32> to vector<2x624xf32>
    %c0_11 = arith.constant 0 : index
    %c0_12 = arith.constant 0 : index
    %15 = vector.load %arg3[%c0_11, %c0_12] : memref<2x624xf32, #tpu.memory_space<vmem>>, vector<2x624xf32>
    tpu.vector_store %arg3[%c0_11, %c0_12], %14 {strides = array<i32>} : memref<2x624xf32, #tpu.memory_space<vmem>>, vector<2x624xf32>,
    return
  }
}

</mosaic_0001>

<llo_original>
// kernel: tpu_custom_call.1
$region0: #{tpu_custom_call.1}
  #allocation0 [shape = 'u32[]', space=smem, size = 0x4, offset = 0x4, fixed_abs, tag = 'smem constant byte address 0x4 - core index']
  #allocation1 [shape = 'u32[72,128]{1,0:T(1,128)}', space=vmem, size = 0x9000, scoped, tag = 'internal scratch']
  %s0 = inlined_call_operand.hbm [shape: f32[2,624], index: 0, kind: input, shape index: {}]
  %s1 = inlined_call_operand.hbm [shape: f32[640,640], index: 1, kind: input, shape index: {}]
  %s2 = inlined_call_operand.hbm [shape: f32[1,640], index: 2, kind: input, shape index: {}]
  %s3 = inlined_call_operand.hbm [shape: f32[2,624], index: 3, kind: output, shape index: {}]
  %s4 = sld [smem:[#allocation0]]
  $region34: #{tpu_custom_call.1} parent=0
    _
  %s6 = ssub.s32 1, %s4
  %s7 = scalar_select 0, %s6, %s4
  $region1: #{tpu_custom_call.1} parent=0
    #allocation2 [shape = 'u8[5120]{0}', space=vmem, size = 0x1400, scoped, tag = 'input window, operand 0, single buffered']
    #allocation3 [shape = 's32[1]{0}', space=sflag, size = 0x4, scoped, tag = 'scoped memory for tpu_custom_call.1']
    #allocation4 [shape = 's32[1]{0}', space=sflag, size = 0x4, scoped, tag = 'scoped memory for tpu_custom_call.1']
    #allocation5 [shape = 'u8[1638400]{0}', space=vmem, size = 0x190000, scoped, tag = 'input window, operand 1, single buffered']
    #allocation6 [shape = 's32[1]{0}', space=sflag, size = 0x4, scoped, tag = 'scoped memory for tpu_custom_call.1']
    #allocation7 [shape = 'u8[2560]{0}', space=vmem, size = 0xc00, scoped, tag = 'input window, operand 2, single buffered']
    #allocation8 [shape = 'u8[5120]{0}', space=vmem, size = 0x1400, scoped, tag = 'output window, operand 0, single buffered']
    %8 = vsyncpa [#allocation3], 0
    %9 = vsyncpa [#allocation6], 0
    %10 = vsyncpa [#allocation4], 0
    // Predicated region
    $region2: #{tpu_custom_call.1} parent=1 // pred_check
      _
    $region3: #{tpu_custom_call.1} parent=1 // pred_check_branch
      %12 = sbr.rel (0) target = $region5
    $region4: #{tpu_custom_call.1} parent=1 // pred_region
      %14 = vsyncadd [#allocation3], 0
      %s16 = sshll.u32 %s0, 4
      %s17 = int_to_ptr.hbm [resolvable:$true] %s16
      %s18 = sshll.u32 [#allocation2], 4
      %s19 = int_to_ptr.vmem [resolvable:$true] %s18
      %21 = dma.hbm_to_vmem [thread:$0]  %s17, 160, %s19, [#allocation3]
    $region5: #{tpu_custom_call.1} parent=1 // pred_fallthru
      _
    // Predicated region
    $region6: #{tpu_custom_call.1} parent=1 // pred_check
      _
    $region7: #{tpu_custom_call.1} parent=1 // pred_check_branch
      %23 = sbr.rel (0) target = $region9
    $region8: #{tpu_custom_call.1} parent=1 // pred_region
      %25 = vsyncadd [#allocation6], 0
      %s26 = sshll.u32 %s1, 4
      %s27 = int_to_ptr.hbm [resolvable:$true] %s26
      %s28 = sshll.u32 [#allocation5], 4
      %s29 = int_to_ptr.vmem [resolvable:$true] %s28
      %34 = dma.hbm_to_vmem [thread:$0]  %s27, 51200, %s29, [#allocation6], 640, 640, 40
    $region9: #{tpu_custom_call.1} parent=1 // pred_fallthru
      _
    // Predicated region
    $region10: #{tpu_custom_call.1} parent=1 // pred_check
      _
    $region11: #{tpu_custom_call.1} parent=1 // pred_check_branch
      %36 = sbr.rel (0) target = $region13
    $region12: #{tpu_custom_call.1} parent=1 // pred_region
      %38 = vsyncadd [#allocation6], 0
      %s40 = sshll.u32 %s2, 4
      %s41 = int_to_ptr.hbm [resolvable:$true] %s40
      %s42 = sshll.u32 [#allocation7], 4
      %s43 = int_to_ptr.vmem [resolvable:$true] %s42
      %45 = dma.hbm_to_vmem [thread:$0]  %s41, 80, %s43, [#allocation6]
    $region13: #{tpu_custom_call.1} parent=1 // pred_fallthru
      _
    // Predicated region
    $region14: #{tpu_custom_call.1} parent=1 // pred_check
      _
    $region15: #{tpu_custom_call.1} parent=1 // pred_check_branch
      %47 = sbr.rel (0) target = $region17
    $region16: #{tpu_custom_call.1} parent=1 // pred_region
      %49 = dma.done [#allocation3], 160
    $region17: #{tpu_custom_call.1} parent=1 // pred_fallthru
      _
    // Predicated region
    $region18: #{tpu_custom_call.1} parent=1 // pred_check
      _
    $region19: #{tpu_custom_call.1} parent=1 // pred_check_branch
      %51 = sbr.rel (0) target = $region21
    $region20: #{tpu_custom_call.1} parent=1 // pred_region
      %53 = dma.done [#allocation6], 51200
    $region21: #{tpu_custom_call.1} parent=1 // pred_fallthru
      _
    // Predicated region
    $region22: #{tpu_custom_call.1} parent=1 // pred_check
      _
    $region23: #{tpu_custom_call.1} parent=1 // pred_check_branch
      %55 = sbr.rel (0) target = $region25
    $region24: #{tpu_custom_call.1} parent=1 // pred_region
      %57 = dma.done [#allocation6], 80
    $region25: #{tpu_custom_call.1} parent=1 // pred_fallthru
      _
    %v58 = vld [vmem:[#allocation7] sm:$0x1f]
    %v59 = vld [vmem:[#allocation2] sm:$0xff]
    %v60 = vld [vmem:[#allocation2 + $0x8] sm:$0x3]
    %v61 = vld [vmem:[#allocation5] sm:$0xff]
    %v62 = vld [vmem:[#allocation5 + $0x8] sm:$0xff]
    %v63 = vld [vmem:[#allocation5 + $0x10] sm:$0xff]
    %v64 = vld [vmem:[#allocation5 + $0x18] sm:$0xff]
    %v65 = vld [vmem:[#allocation5 + $0x20] sm:$0xff]
    %v66 = vld [vmem:[#allocation5 + $0x28] sm:$0xff]
    %v67 = vld [vmem:[#allocation5 + $0x30] sm:$0xff]
    %v68 = vld [vmem:[#allocation5 + $0x38] sm:$0xff]
    %v69 = vld [vmem:[#allocation5 + $0x40] sm:$0xff]
    %v70 = vld [vmem:[#allocation5 + $0x48] sm:$0xff]
    %v71 = vld [vmem:[#allocation5 + $0x50] sm:$0xff]
    %v72 = vld [vmem:[#allocation5 + $0x58] sm:$0xff]
    %v73 = vld [vmem:[#allocation5 + $0x60] sm:$0xff]
    %v74 = vld [vmem:[#allocation5 + $0x68] sm:$0xff]
    %v75 = vld [vmem:[#allocation5 + $0x70] sm:$0xff]
    %v76 = vld [vmem:[#allocation5 + $0x78] sm:$0xff]
    %v77 = vld [vmem:[#allocation5 + $0x80] sm:$0xff]
    %v78 = vld [vmem:[#allocation5 + $0x88] sm:$0xff]
    %v79 = vld [vmem:[#allocation5 + $0x90] sm:$0xff]
    %v80 = vld [vmem:[#allocation5 + $0x98] sm:$0xff]
    %v81 = vld [vmem:[#allocation5 + $0xa0] sm:$0xff]
    %v82 = vld [vmem:[#allocation5 + $0xa8] sm:$0xff]
    %v83 = vld [vmem:[#allocation5 + $0xb0] sm:$0xff]
    %v84 = vld [vmem:[#allocation5 + $0xb8] sm:$0xff]
    %v85 = vld [vmem:[#allocation5 + $0xc0] sm:$0xff]
    %v86 = vld [vmem:[#allocation5 + $0xc8] sm:$0xff]
    %v87 = vld [vmem:[#allocation5 + $0xd0] sm:$0xff]
    %v88 = vld [vmem:[#allocation5 + $0xd8] sm:$0xff]
    %v89 = vld [vmem:[#allocation5 + $0xe0] sm:$0xff]
    %v90 = vld [vmem:[#allocation5 + $0xe8] sm:$0xff]
    %v91 = vld [vmem:[#allocation5 + $0xf0] sm:$0xff]
    %v92 = vld [vmem:[#allocation5 + $0xf8] sm:$0xff]
    %v93 = vld [vmem:[#allocation5 + $0x100] sm:$0xff]
    %v94 = vld [vmem:[#allocation5 + $0x108] sm:$0xff]
    %v95 = vld [vmem:[#allocation5 + $0x110] sm:$0xff]
    %v96 = vld [vmem:[#allocation5 + $0x118] sm:$0xff]
    %v97 = vld [vmem:[#allocation5 + $0x120] sm:$0xff]
    %v98 = vld [vmem:[#allocation5 + $0x128] sm:$0xff]
    %v99 = vld [vmem:[#allocation5 + $0x130] sm:$0xff]
    %v100 = vld [vmem:[#allocation5 + $0x138] sm:$0xff]
    %v101 = vld [vmem:[#allocation5 + $0x140] sm:$0xff]
    %v102 = vld [vmem:[#allocation5 + $0x148] sm:$0xff]
    %v103 = vld [vmem:[#allocation5 + $0x150] sm:$0xff]
    %v104 = vld [vmem:[#allocation5 + $0x158] sm:$0xff]
    %v105 = vld [vmem:[#allocation5 + $0x160] sm:$0xff]
    %v106 = vld [vmem:[#allocation5 + $0x168] sm:$0xff]
    %v107 = vld [vmem:[#allocation5 + $0x170] sm:$0xff]
    %v108 = vld [vmem:[#allocation5 + $0x178] sm:$0xff]
    %v109 = vld [vmem:[#allocation5 + $0x180] sm:$0xff]
    %v110 = vld [vmem:[#allocation5 + $0x188] sm:$0xff]
    %v111 = vld [vmem:[#allocation5 + $0x190] sm:$0xff]
    %v112 = vld [vmem:[#allocation5 + $0x198] sm:$0xff]
    %v113 = vld [vmem:[#allocation5 + $0x1a0] sm:$0xff]
    %v114 = vld [vmem:[#allocation5 + $0x1a8] sm:$0xff]
    %v115 = vld [vmem:[#allocation5 + $0x1b0] sm:$0xff]
    %v116 = vld [vmem:[#allocation5 + $0x1b8] sm:$0xff]
    %v117 = vld [vmem:[#allocation5 + $0x1c0] sm:$0xff]
    %v118 = vld [vmem:[#allocation5 + $0x1c8] sm:$0xff]
    %v119 = vld [vmem:[#allocation5 + $0x1d0] sm:$0xff]
    %v120 = vld [vmem:[#allocation5 + $0x1d8] sm:$0xff]
    %v121 = vld [vmem:[#allocation5 + $0x1e0] sm:$0xff]
    %v122 = vld [vmem:[#allocation5 + $0x1e8] sm:$0xff]
    %v123 = vld [vmem:[#allocation5 + $0x1f0] sm:$0xff]
    %v124 = vld [vmem:[#allocation5 + $0x1f8] sm:$0xff]
    %v125 = vld [vmem:[#allocation5 + $0x200] sm:$0xff]
    %v126 = vld [vmem:[#allocation5 + $0x208] sm:$0xff]
    %v127 = vld [vmem:[#allocation5 + $0x210] sm:$0xff]
    %v128 = vld [vmem:[#allocation5 + $0x218] sm:$0xff]
    %v129 = vld [vmem:[#allocation5 + $0x220] sm:$0xff]
    %v130 = vld [vmem:[#allocation5 + $0x228] sm:$0xff]
    %v131 = vld [vmem:[#allocation5 + $0x230] sm:$0xff]
    %v132 = vld [vmem:[#allocation5 + $0x238] sm:$0xff]
    %v133 = vld [vmem:[#allocation5 + $0x240] sm:$0xff]
    %v134 = vld [vmem:[#allocation5 + $0x248] sm:$0xff]
    %v135 = vld [vmem:[#allocation5 + $0x250] sm:$0xff]
    %v136 = vld [vmem:[#allocation5 + $0x258] sm:$0xff]
    %v137 = vld [vmem:[#allocation5 + $0x260] sm:$0xff]
    %v138 = vld [vmem:[#allocation5 + $0x268] sm:$0xff]
    %v139 = vld [vmem:[#allocation5 + $0x270] sm:$0xff]
    %v140 = vld [vmem:[#allocation5 + $0x278] sm:$0xff]
    %v141 = vld [vmem:[#allocation5 + $0x280] sm:$0xff]
    %v142 = vld [vmem:[#allocation5 + $0x288] sm:$0xff]
    %v143 = vld [vmem:[#allocation5 + $0x290] sm:$0xff]
    %v144 = vld [vmem:[#allocation5 + $0x298] sm:$0xff]
    %v145 = vld [vmem:[#allocation5 + $0x2a0] sm:$0xff]
    %v146 = vld [vmem:[#allocation5 + $0x2a8] sm:$0xff]
    %v147 = vld [vmem:[#allocation5 + $0x2b0] sm:$0xff]
    %v148 = vld [vmem:[#allocation5 + $0x2b8] sm:$0xff]
    %v149 = vld [vmem:[#allocation5 + $0x2c0] sm:$0xff]
    %v150 = vld [vmem:[#allocation5 + $0x2c8] sm:$0xff]
    %v151 = vld [vmem:[#allocation5 + $0x2d0] sm:$0xff]
    %v152 = vld [vmem:[#allocation5 + $0x2d8] sm:$0xff]
    %v153 = vld [vmem:[#allocation5 + $0x2e0] sm:$0xff]
    %v154 = vld [vmem:[#allocation5 + $0x2e8] sm:$0xff]
    %v155 = vld [vmem:[#allocation5 + $0x2f0] sm:$0xff]
    %v156 = vld [vmem:[#allocation5 + $0x2f8] sm:$0xff]
    %v157 = vld [vmem:[#allocation5 + $0x300] sm:$0xff]
    %v158 = vld [vmem:[#allocation5 + $0x308] sm:$0xff]
    %v159 = vld [vmem:[#allocation5 + $0x310] sm:$0xff]
    %v160 = vld [vmem:[#allocation5 + $0x318] sm:$0xff]
    %v161 = vld [vmem:[#allocation5 + $0x320] sm:$0xff]
    %v162 = vld [vmem:[#allocation5 + $0x328] sm:$0xff]
    %v163 = vld [vmem:[#allocation5 + $0x330] sm:$0xff]
    %v164 = vld [vmem:[#allocation5 + $0x338] sm:$0xff]
    %v165 = vld [vmem:[#allocation5 + $0x340] sm:$0xff]
    %v166 = vld [vmem:[#allocation5 + $0x348] sm:$0xff]
    %v167 = vld [vmem:[#allocation5 + $0x350] sm:$0xff]
    %v168 = vld [vmem:[#allocation5 + $0x358] sm:$0xff]
    %v169 = vld [vmem:[#allocation5 + $0x360] sm:$0xff]
    %v170 = vld [vmem:[#allocation5 + $0x368] sm:$0xff]
    %v171 = vld [vmem:[#allocation5 + $0x370] sm:$0xff]
    %v172 = vld [vmem:[#allocation5 + $0x378] sm:$0xff]
    %v173 = vld [vmem:[#allocation5 + $0x380] sm:$0xff]
    %v174 = vld [vmem:[#allocation5 + $0x388] sm:$0xff]
    %v175 = vld [vmem:[#allocation5 + $0x390] sm:$0xff]
    %v176 = vld [vmem:[#allocation5 + $0x398] sm:$0xff]
    %v177 = vld [vmem:[#allocation5 + $0x3a0] sm:$0xff]
    %v178 = vld [vmem:[#allocation5 + $0x3a8] sm:$0xff]
    %v179 = vld [vmem:[#allocation5 + $0x3b0] sm:$0xff]
    %v180 = vld [vmem:[#allocation5 + $0x3b8] sm:$0xff]
    %v181 = vld [vmem:[#allocation5 + $0x3c0] sm:$0xff]
    %v182 = vld [vmem:[#allocation5 + $0x3c8] sm:$0xff]
    %v183 = vld [vmem:[#allocation5 + $0x3d0] sm:$0xff]
    %v184 = vld [vmem:[#allocation5 + $0x3d8] sm:$0xff]
    %v185 = vld [vmem:[#allocation5 + $0x3e0] sm:$0xff]
    %v186 = vld [vmem:[#allocation5 + $0x3e8] sm:$0xff]
    %v187 = vld [vmem:[#allocation5 + $0x3f0] sm:$0xff]
    %v188 = vld [vmem:[#allocation5 + $0x3f8] sm:$0xff]
    %v189 = vld [vmem:[#allocation5 + $0x400] sm:$0xff]
    %v190 = vld [vmem:[#allocation5 + $0x408] sm:$0xff]
    %v191 = vld [vmem:[#allocation5 + $0x410] sm:$0xff]
    %v192 = vld [vmem:[#allocation5 + $0x418] sm:$0xff]
    %v193 = vld [vmem:[#allocation5 + $0x420] sm:$0xff]
    %v194 = vld [vmem:[#allocation5 + $0x428] sm:$0xff]
    %v195 = vld [vmem:[#allocation5 + $0x430] sm:$0xff]
    %v196 = vld [vmem:[#allocation5 + $0x438] sm:$0xff]
    %v197 = vld [vmem:[#allocation5 + $0x440] sm:$0xff]
    %v198 = vld [vmem:[#allocation5 + $0x448] sm:$0xff]
    %v199 = vld [vmem:[#allocation5 + $0x450] sm:$0xff]
    %v200 = vld [vmem:[#allocation5 + $0x458] sm:$0xff]
    %v201 = vld [vmem:[#allocation5 + $0x460] sm:$0xff]
    %v202 = vld [vmem:[#allocation5 + $0x468] sm:$0xff]
    %v203 = vld [vmem:[#allocation5 + $0x470] sm:$0xff]
    %v204 = vld [vmem:[#allocation5 + $0x478] sm:$0xff]
    %v205 = vld [vmem:[#allocation5 + $0x480] sm:$0xff]
    %v206 = vld [vmem:[#allocation5 + $0x488] sm:$0xff]
    %v207 = vld [vmem:[#allocation5 + $0x490] sm:$0xff]
    %v208 = vld [vmem:[#allocation5 + $0x498] sm:$0xff]
    %v209 = vld [vmem:[#allocation5 + $0x4a0] sm:$0xff]
    %v210 = vld [vmem:[#allocation5 + $0x4a8] sm:$0xff]
    %v211 = vld [vmem:[#allocation5 + $0x4b0] sm:$0xff]
    %v212 = vld [vmem:[#allocation5 + $0x4b8] sm:$0xff]
    %v213 = vld [vmem:[#allocation5 + $0x4c0] sm:$0xff]
    %v214 = vld [vmem:[#allocation5 + $0x4c8] sm:$0xff]
    %v215 = vld [vmem:[#allocation5 + $0x4d0] sm:$0xff]
    %v216 = vld [vmem:[#allocation5 + $0x4d8] sm:$0xff]
    %v217 = vld [vmem:[#allocation5 + $0x4e0] sm:$0xff]
    %v218 = vld [vmem:[#allocation5 + $0x4e8] sm:$0xff]
    %v219 = vld [vmem:[#allocation5 + $0x4f0] sm:$0xff]
    %v220 = vld [vmem:[#allocation5 + $0x4f8] sm:$0xff]
    %v221 = vld [vmem:[#allocation5 + $0x500] sm:$0xff]
    %v222 = vld [vmem:[#allocation5 + $0x508] sm:$0xff]
    %v223 = vld [vmem:[#allocation5 + $0x510] sm:$0xff]
    %v224 = vld [vmem:[#allocation5 + $0x518] sm:$0xff]
    %v225 = vld [vmem:[#allocation5 + $0x520] sm:$0xff]
    %v226 = vld [vmem:[#allocation5 + $0x528] sm:$0xff]
    %v227 = vld [vmem:[#allocation5 + $0x530] sm:$0xff]
    %v228 = vld [vmem:[#allocation5 + $0x538] sm:$0xff]
    %v229 = vld [vmem:[#allocation5 + $0x540] sm:$0xff]
    %v230 = vld [vmem:[#allocation5 + $0x548] sm:$0xff]
    %v231 = vld [vmem:[#allocation5 + $0x550] sm:$0xff]
    %v232 = vld [vmem:[#allocation5 + $0x558] sm:$0xff]
    %v233 = vld [vmem:[#allocation5 + $0x560] sm:$0xff]
    %v234 = vld [vmem:[#allocation5 + $0x568] sm:$0xff]
    %v235 = vld [vmem:[#allocation5 + $0x570] sm:$0xff]
    %v236 = vld [vmem:[#allocation5 + $0x578] sm:$0xff]
    %v237 = vld [vmem:[#allocation5 + $0x580] sm:$0xff]
    %v238 = vld [vmem:[#allocation5 + $0x588] sm:$0xff]
    %v239 = vld [vmem:[#allocation5 + $0x590] sm:$0xff]
    %v240 = vld [vmem:[#allocation5 + $0x598] sm:$0xff]
    %v241 = vld [vmem:[#allocation5 + $0x5a0] sm:$0xff]
    %v242 = vld [vmem:[#allocation5 + $0x5a8] sm:$0xff]
    %v243 = vld [vmem:[#allocation5 + $0x5b0] sm:$0xff]
    %v244 = vld [vmem:[#allocation5 + $0x5b8] sm:$0xff]
    %v245 = vld [vmem:[#allocation5 + $0x5c0] sm:$0xff]
    %v246 = vld [vmem:[#allocation5 + $0x5c8] sm:$0xff]
    %v247 = vld [vmem:[#allocation5 + $0x5d0] sm:$0xff]
    %v248 = vld [vmem:[#allocation5 + $0x5d8] sm:$0xff]
    %v249 = vld [vmem:[#allocation5 + $0x5e0] sm:$0xff]
    %v250 = vld [vmem:[#allocation5 + $0x5e8] sm:$0xff]
    %v251 = vld [vmem:[#allocation5 + $0x5f0] sm:$0xff]
    %v252 = vld [vmem:[#allocation5 + $0x5f8] sm:$0xff]
    %v253 = vld [vmem:[#allocation5 + $0x600] sm:$0xff]
    %v254 = vld [vmem:[#allocation5 + $0x608] sm:$0xff]
    %v255 = vld [vmem:[#allocation5 + $0x610] sm:$0xff]
    %v256 = vld [vmem:[#allocation5 + $0x618] sm:$0xff]
    %v257 = vld [vmem:[#allocation5 + $0x620] sm:$0xff]
    %v258 = vld [vmem:[#allocation5 + $0x628] sm:$0xff]
    %v259 = vld [vmem:[#allocation5 + $0x630] sm:$0xff]
    %v260 = vld [vmem:[#allocation5 + $0x638] sm:$0xff]
    %v261 = vld [vmem:[#allocation5 + $0x640] sm:$0xff]
    %v262 = vld [vmem:[#allocation5 + $0x648] sm:$0xff]
    %v263 = vld [vmem:[#allocation5 + $0x650] sm:$0xff]
    %v264 = vld [vmem:[#allocation5 + $0x658] sm:$0xff]
    %v265 = vld [vmem:[#allocation5 + $0x660] sm:$0xff]
    %v266 = vld [vmem:[#allocation5 + $0x668] sm:$0xff]
    %v267 = vld [vmem:[#allocation5 + $0x670] sm:$0xff]
    %v268 = vld [vmem:[#allocation5 + $0x678] sm:$0xff]
    %v269 = vld [vmem:[#allocation5 + $0x680] sm:$0xff]
    %v270 = vld [vmem:[#allocation5 + $0x688] sm:$0xff]
    %v271 = vld [vmem:[#allocation5 + $0x690] sm:$0xff]
    %v272 = vld [vmem:[#allocation5 + $0x698] sm:$0xff]
    %v273 = vld [vmem:[#allocation5 + $0x6a0] sm:$0xff]
    %v274 = vld [vmem:[#allocation5 + $0x6a8] sm:$0xff]
    %v275 = vld [vmem:[#allocation5 + $0x6b0] sm:$0xff]
    %v276 = vld [vmem:[#allocation5 + $0x6b8] sm:$0xff]
    %v277 = vld [vmem:[#allocation5 + $0x6c0] sm:$0xff]
    %v278 = vld [vmem:[#allocation5 + $0x6c8] sm:$0xff]
    %v279 = vld [vmem:[#allocation5 + $0x6d0] sm:$0xff]
    %v280 = vld [vmem:[#allocation5 + $0x6d8] sm:$0xff]
    %v281 = vld [vmem:[#allocation5 + $0x6e0] sm:$0xff]
    %v282 = vld [vmem:[#allocation5 + $0x6e8] sm:$0xff]
    %v283 = vld [vmem:[#allocation5 + $0x6f0] sm:$0xff]
    %v284 = vld [vmem:[#allocation5 + $0x6f8] sm:$0xff]
    %v285 = vld [vmem:[#allocation5 + $0x700] sm:$0xff]
    %v286 = vld [vmem:[#allocation5 + $0x708] sm:$0xff]
    %v287 = vld [vmem:[#allocation5 + $0x710] sm:$0xff]
    %v288 = vld [vmem:[#allocation5 + $0x718] sm:$0xff]
    %v289 = vld [vmem:[#allocation5 + $0x720] sm:$0xff]
    %v290 = vld [vmem:[#allocation5 + $0x728] sm:$0xff]
    %v291 = vld [vmem:[#allocation5 + $0x730] sm:$0xff]
    %v292 = vld [vmem:[#allocation5 + $0x738] sm:$0xff]
    %v293 = vld [vmem:[#allocation5 + $0x740] sm:$0xff]
    %v294 = vld [vmem:[#allocation5 + $0x748] sm:$0xff]
    %v295 = vld [vmem:[#allocation5 + $0x750] sm:$0xff]
    %v296 = vld [vmem:[#allocation5 + $0x758] sm:$0xff]
    %v297 = vld [vmem:[#allocation5 + $0x760] sm:$0xff]
    %v298 = vld [vmem:[#allocation5 + $0x768] sm:$0xff]
    %v299 = vld [vmem:[#allocation5 + $0x770] sm:$0xff]
    %v300 = vld [vmem:[#allocation5 + $0x778] sm:$0xff]
    %v301 = vld [vmem:[#allocation5 + $0x780] sm:$0xff]
    %v302 = vld [vmem:[#allocation5 + $0x788] sm:$0xff]
    %v303 = vld [vmem:[#allocation5 + $0x790] sm:$0xff]
    %v304 = vld [vmem:[#allocation5 + $0x798] sm:$0xff]
    %v305 = vld [vmem:[#allocation5 + $0x7a0] sm:$0xff]
    %v306 = vld [vmem:[#allocation5 + $0x7a8] sm:$0xff]
    %v307 = vld [vmem:[#allocation5 + $0x7b0] sm:$0xff]
    %v308 = vld [vmem:[#allocation5 + $0x7b8] sm:$0xff]
    %v309 = vld [vmem:[#allocation5 + $0x7c0] sm:$0xff]
    %v310 = vld [vmem:[#allocation5 + $0x7c8] sm:$0xff]
    %v311 = vld [vmem:[#allocation5 + $0x7d0] sm:$0xff]
    %v312 = vld [vmem:[#allocation5 + $0x7d8] sm:$0xff]
    %v313 = vld [vmem:[#allocation5 + $0x7e0] sm:$0xff]
    %v314 = vld [vmem:[#allocation5 + $0x7e8] sm:$0xff]
    %v315 = vld [vmem:[#allocation5 + $0x7f0] sm:$0xff]
    %v316 = vld [vmem:[#allocation5 + $0x7f8] sm:$0xff]
    %v317 = vld [vmem:[#allocation5 + $0x800] sm:$0xff]
    %v318 = vld [vmem:[#allocation5 + $0x808] sm:$0xff]
    %v319 = vld [vmem:[#allocation5 + $0x810] sm:$0xff]
    %v320 = vld [vmem:[#allocation5 + $0x818] sm:$0xff]
    %v321 = vld [vmem:[#allocation5 + $0x820] sm:$0xff]
    %v322 = vld [vmem:[#allocation5 + $0x828] sm:$0xff]
    %v323 = vld [vmem:[#allocation5 + $0x830] sm:$0xff]
    %v324 = vld [vmem:[#allocation5 + $0x838] sm:$0xff]
    %v325 = vld [vmem:[#allocation5 + $0x840] sm:$0xff]
    %v326 = vld [vmem:[#allocation5 + $0x848] sm:$0xff]
    %v327 = vld [vmem:[#allocation5 + $0x850] sm:$0xff]
    %v328 = vld [vmem:[#allocation5 + $0x858] sm:$0xff]
    %v329 = vld [vmem:[#allocation5 + $0x860] sm:$0xff]
    %v330 = vld [vmem:[#allocation5 + $0x868] sm:$0xff]
    %v331 = vld [vmem:[#allocation5 + $0x870] sm:$0xff]
    %v332 = vld [vmem:[#allocation5 + $0x878] sm:$0xff]
    %v333 = vld [vmem:[#allocation5 + $0x880] sm:$0xff]
    %v334 = vld [vmem:[#allocation5 + $0x888] sm:$0xff]
    %v335 = vld [vmem:[#allocation5 + $0x890] sm:$0xff]
    %v336 = vld [vmem:[#allocation5 + $0x898] sm:$0xff]
    %v337 = vld [vmem:[#allocation5 + $0x8a0] sm:$0xff]
    %v338 = vld [vmem:[#allocation5 + $0x8a8] sm:$0xff]
    %v339 = vld [vmem:[#allocation5 + $0x8b0] sm:$0xff]
    %v340 = vld [vmem:[#allocation5 + $0x8b8] sm:$0xff]
    %v341 = vld [vmem:[#allocation5 + $0x8c0] sm:$0xff]
    %v342 = vld [vmem:[#allocation5 + $0x8c8] sm:$0xff]
    %v343 = vld [vmem:[#allocation5 + $0x8d0] sm:$0xff]
    %v344 = vld [vmem:[#allocation5 + $0x8d8] sm:$0xff]
    %v345 = vld [vmem:[#allocation5 + $0x8e0] sm:$0xff]
    %v346 = vld [vmem:[#allocation5 + $0x8e8] sm:$0xff]
    %v347 = vld [vmem:[#allocation5 + $0x8f0] sm:$0xff]
    %v348 = vld [vmem:[#allocation5 + $0x8f8] sm:$0xff]
    %v349 = vld [vmem:[#allocation5 + $0x900] sm:$0xff]
    %v350 = vld [vmem:[#allocation5 + $0x908] sm:$0xff]
    %v351 = vld [vmem:[#allocation5 + $0x910] sm:$0xff]
    %v352 = vld [vmem:[#allocation5 + $0x918] sm:$0xff]
    %v353 = vld [vmem:[#allocation5 + $0x920] sm:$0xff]
    %v354 = vld [vmem:[#allocation5 + $0x928] sm:$0xff]
    %v355 = vld [vmem:[#allocation5 + $0x930] sm:$0xff]
    %v356 = vld [vmem:[#allocation5 + $0x938] sm:$0xff]
    %v357 = vld [vmem:[#allocation5 + $0x940] sm:$0xff]
    %v358 = vld [vmem:[#allocation5 + $0x948] sm:$0xff]
    %v359 = vld [vmem:[#allocation5 + $0x950] sm:$0xff]
    %v360 = vld [vmem:[#allocation5 + $0x958] sm:$0xff]
    %v361 = vld [vmem:[#allocation5 + $0x960] sm:$0xff]
    %v362 = vld [vmem:[#allocation5 + $0x968] sm:$0xff]
    %v363 = vld [vmem:[#allocation5 + $0x970] sm:$0xff]
    %v364 = vld [vmem:[#allocation5 + $0x978] sm:$0xff]
    %v365 = vld [vmem:[#allocation5 + $0x980] sm:$0xff]
    %v366 = vld [vmem:[#allocation5 + $0x988] sm:$0xff]
    %v367 = vld [vmem:[#allocation5 + $0x990] sm:$0xff]
    %v368 = vld [vmem:[#allocation5 + $0x998] sm:$0xff]
    %v369 = vld [vmem:[#allocation5 + $0x9a0] sm:$0xff]
    %v370 = vld [vmem:[#allocation5 + $0x9a8] sm:$0xff]
    %v371 = vld [vmem:[#allocation5 + $0x9b0] sm:$0xff]
    %v372 = vld [vmem:[#allocation5 + $0x9b8] sm:$0xff]
    %v373 = vld [vmem:[#allocation5 + $0x9c0] sm:$0xff]
    %v374 = vld [vmem:[#allocation5 + $0x9c8] sm:$0xff]
    %v375 = vld [vmem:[#allocation5 + $0x9d0] sm:$0xff]
    %v376 = vld [vmem:[#allocation5 + $0x9d8] sm:$0xff]
    %v377 = vld [vmem:[#allocation5 + $0x9e0] sm:$0xff]
    %v378 = vld [vmem:[#allocation5 + $0x9e8] sm:$0xff]
    %v379 = vld [vmem:[#allocation5 + $0x9f0] sm:$0xff]
    %v380 = vld [vmem:[#allocation5 + $0x9f8] sm:$0xff]
    %v381 = vld [vmem:[#allocation5 + $0xa00] sm:$0xff]
    %v382 = vld [vmem:[#allocation5 + $0xa08] sm:$0xff]
    %v383 = vld [vmem:[#allocation5 + $0xa10] sm:$0xff]
    %v384 = vld [vmem:[#allocation5 + $0xa18] sm:$0xff]
    %v385 = vld [vmem:[#allocation5 + $0xa20] sm:$0xff]
    %v386 = vld [vmem:[#allocation5 + $0xa28] sm:$0xff]
    %v387 = vld [vmem:[#allocation5 + $0xa30] sm:$0xff]
    %v388 = vld [vmem:[#allocation5 + $0xa38] sm:$0xff]
    %v389 = vld [vmem:[#allocation5 + $0xa40] sm:$0xff]
    %v390 = vld [vmem:[#allocation5 + $0xa48] sm:$0xff]
    %v391 = vld [vmem:[#allocation5 + $0xa50] sm:$0xff]
    %v392 = vld [vmem:[#allocation5 + $0xa58] sm:$0xff]
    %v393 = vld [vmem:[#allocation5 + $0xa60] sm:$0xff]
    %v394 = vld [vmem:[#allocation5 + $0xa68] sm:$0xff]
    %v395 = vld [vmem:[#allocation5 + $0xa70] sm:$0xff]
    %v396 = vld [vmem:[#allocation5 + $0xa78] sm:$0xff]
    %v397 = vld [vmem:[#allocation5 + $0xa80] sm:$0xff]
    %v398 = vld [vmem:[#allocation5 + $0xa88] sm:$0xff]
    %v399 = vld [vmem:[#allocation5 + $0xa90] sm:$0xff]
    %v400 = vld [vmem:[#allocation5 + $0xa98] sm:$0xff]
    %v401 = vld [vmem:[#allocation5 + $0xaa0] sm:$0xff]
    %v402 = vld [vmem:[#allocation5 + $0xaa8] sm:$0xff]
    %v403 = vld [vmem:[#allocation5 + $0xab0] sm:$0xff]
    %v404 = vld [vmem:[#allocation5 + $0xab8] sm:$0xff]
    %v405 = vld [vmem:[#allocation5 + $0xac0] sm:$0xff]
    %v406 = vld [vmem:[#allocation5 + $0xac8] sm:$0xff]
    %v407 = vld [vmem:[#allocation5 + $0xad0] sm:$0xff]
    %v408 = vld [vmem:[#allocation5 + $0xad8] sm:$0xff]
    %v409 = vld [vmem:[#allocation5 + $0xae0] sm:$0xff]
    %v410 = vld [vmem:[#allocation5 + $0xae8] sm:$0xff]
    %v411 = vld [vmem:[#allocation5 + $0xaf0] sm:$0xff]
    %v412 = vld [vmem:[#allocation5 + $0xaf8] sm:$0xff]
    %v413 = vld [vmem:[#allocation5 + $0xb00] sm:$0xff]
    %v414 = vld [vmem:[#allocation5 + $0xb08] sm:$0xff]
    %v415 = vld [vmem:[#allocation5 + $0xb10] sm:$0xff]
    %v416 = vld [vmem:[#allocation5 + $0xb18] sm:$0xff]
    %v417 = vld [vmem:[#allocation5 + $0xb20] sm:$0xff]
    %v418 = vld [vmem:[#allocation5 + $0xb28] sm:$0xff]
    %v419 = vld [vmem:[#allocation5 + $0xb30] sm:$0xff]
    %v420 = vld [vmem:[#allocation5 + $0xb38] sm:$0xff]
    %v421 = vld [vmem:[#allocation5 + $0xb40] sm:$0xff]
    %v422 = vld [vmem:[#allocation5 + $0xb48] sm:$0xff]
    %v423 = vld [vmem:[#allocation5 + $0xb50] sm:$0xff]
    %v424 = vld [vmem:[#allocation5 + $0xb58] sm:$0xff]
    %v425 = vld [vmem:[#allocation5 + $0xb60] sm:$0xff]
    %v426 = vld [vmem:[#allocation5 + $0xb68] sm:$0xff]
    %v427 = vld [vmem:[#allocation5 + $0xb70] sm:$0xff]
    %v428 = vld [vmem:[#allocation5 + $0xb78] sm:$0xff]
    %v429 = vld [vmem:[#allocation5 + $0xb80] sm:$0xff]
    %v430 = vld [vmem:[#allocation5 + $0xb88] sm:$0xff]
    %v431 = vld [vmem:[#allocation5 + $0xb90] sm:$0xff]
    %v432 = vld [vmem:[#allocation5 + $0xb98] sm:$0xff]
    %v433 = vld [vmem:[#allocation5 + $0xba0] sm:$0xff]
    %v434 = vld [vmem:[#allocation5 + $0xba8] sm:$0xff]
    %v435 = vld [vmem:[#allocation5 + $0xbb0] sm:$0xff]
    %v436 = vld [vmem:[#allocation5 + $0xbb8] sm:$0xff]
    %v437 = vld [vmem:[#allocation5 + $0xbc0] sm:$0xff]
    %v438 = vld [vmem:[#allocation5 + $0xbc8] sm:$0xff]
    %v439 = vld [vmem:[#allocation5 + $0xbd0] sm:$0xff]
    %v440 = vld [vmem:[#allocation5 + $0xbd8] sm:$0xff]
    %v441 = vld [vmem:[#allocation5 + $0xbe0] sm:$0xff]
    %v442 = vld [vmem:[#allocation5 + $0xbe8] sm:$0xff]
    %v443 = vld [vmem:[#allocation5 + $0xbf0] sm:$0xff]
    %v444 = vld [vmem:[#allocation5 + $0xbf8] sm:$0xff]
    %v445 = vld [vmem:[#allocation5 + $0xc00] sm:$0xff]
    %v446 = vld [vmem:[#allocation5 + $0xc08] sm:$0xff]
    %v447 = vld [vmem:[#allocation5 + $0xc10] sm:$0xff]
    %v448 = vld [vmem:[#allocation5 + $0xc18] sm:$0xff]
    %v449 = vld [vmem:[#allocation5 + $0xc20] sm:$0xff]
    %v450 = vld [vmem:[#allocation5 + $0xc28] sm:$0xff]
    %v452 = vperm.slane %v58, 0
    %v453 = vperm.slane %v58, 1
    %v454 = vperm.slane %v58, 2
    %v455 = vperm.slane %v58, 3
    %v456 = vperm.slane %v58, 4
    %464 = vst [vmem:[#allocation1] ss:$4 sm:$0xff] %v59
    %s465 = scalar_lea.vmem [#allocation1], 32
    %466 = vst [vmem:[%s465] ss:$4 sm:$0xff] %v60
    %v467 = vld.sshfl [vmem:[#allocation1] sm:$0xff pattern:$0x73625140]
    %v468 = vld.sshfl [vmem:[#allocation1 + $0x8] sm:$0xff pattern:$0x73625140]
    %v469 = vld.sshfl [vmem:[#allocation1 + $0x10] sm:$0xff pattern:$0x73625140]
    %v470 = vld.sshfl [vmem:[#allocation1 + $0x18] sm:$0xff pattern:$0x73625140]
    %v471 = vld.sshfl [vmem:[#allocation1 + $0x20] sm:$0xff pattern:$0x73625140]
    %vm476 = vcmask 916480
    %v477 = vsel %vm476, %v471, 0
    %479 = vmatpush.msra.mxu0 %v136
    %480 = vmatpush.msra.mxu0 %v131
    %481 = vmatpush.msra.mxu0 %v126
    %482 = vmatpush.msra.mxu0 %v121
    %483 = vmatpush.msra.mxu0 %v116
    %484 = vmatpush.msra.mxu0 %v111
    %485 = vmatpush.msra.mxu0 %v106
    %486 = vmatpush.msra.mxu0 %v101
    %487 = vmatpush.msra.mxu0 %v96
    %488 = vmatpush.msra.mxu0 %v91
    %489 = vmatpush.msra.mxu0 %v86
    %490 = vmatpush.msra.mxu0 %v81
    %491 = vmatpush.msra.mxu0 %v76
    %492 = vmatpush.msra.mxu0 %v71
    %493 = vmatpush.msra.mxu0 %v66
    %494 = vmatpush.msra.mxu0 %v61
    %495 = vmatmul.f32.gmra.mxu0 %v467
    %v496 = vpop.f32.mrf.mxu0
    %v497 = vadd.f32 %v452, %v496
    %498 = vdwg.mxu0
    %499 = vmatpush.msra.mxu0 %v216
    %500 = vmatpush.msra.mxu0 %v211
    %501 = vmatpush.msra.mxu0 %v206
    %502 = vmatpush.msra.mxu0 %v201
    %503 = vmatpush.msra.mxu0 %v196
    %504 = vmatpush.msra.mxu0 %v191
    %505 = vmatpush.msra.mxu0 %v186
    %506 = vmatpush.msra.mxu0 %v181
    %507 = vmatpush.msra.mxu0 %v176
    %508 = vmatpush.msra.mxu0 %v171
    %509 = vmatpush.msra.mxu0 %v166
    %510 = vmatpush.msra.mxu0 %v161
    %511 = vmatpush.msra.mxu0 %v156
    %512 = vmatpush.msra.mxu0 %v151
    %513 = vmatpush.msra.mxu0 %v146
    %514 = vmatpush.msra.mxu0 %v141
    %515 = vmatmul.f32.gmra.mxu0 %v468
    %v516 = vpop.f32.mrf.mxu0
    %v517 = vadd.f32 %v497, %v516
    %518 = vdwg.mxu0
    %519 = vmatpush.msra.mxu0 %v296
    %520 = vmatpush.msra.mxu0 %v291
    %521 = vmatpush.msra.mxu0 %v286
    %522 = vmatpush.msra.mxu0 %v281
    %523 = vmatpush.msra.mxu0 %v276
    %524 = vmatpush.msra.mxu0 %v271
    %525 = vmatpush.msra.mxu0 %v266
    %526 = vmatpush.msra.mxu0 %v261
    %527 = vmatpush.msra.mxu0 %v256
    %528 = vmatpush.msra.mxu0 %v251
    %529 = vmatpush.msra.mxu0 %v246
    %530 = vmatpush.msra.mxu0 %v241
    %531 = vmatpush.msra.mxu0 %v236
    %532 = vmatpush.msra.mxu0 %v231
    %533 = vmatpush.msra.mxu0 %v226
    %534 = vmatpush.msra.mxu0 %v221
    %535 = vmatmul.f32.gmra.mxu0 %v469
    %v536 = vpop.f32.mrf.mxu0
    %v537 = vadd.f32 %v517, %v536
    %538 = vdwg.mxu0
    %539 = vmatpush.msra.mxu0 %v376
    %540 = vmatpush.msra.mxu0 %v371
    %541 = vmatpush.msra.mxu0 %v366
    %542 = vmatpush.msra.mxu0 %v361
    %543 = vmatpush.msra.mxu0 %v356
    %544 = vmatpush.msra.mxu0 %v351
    %545 = vmatpush.msra.mxu0 %v346
    %546 = vmatpush.msra.mxu0 %v341
    %547 = vmatpush.msra.mxu0 %v336
    %548 = vmatpush.msra.mxu0 %v331
    %549 = vmatpush.msra.mxu0 %v326
    %550 = vmatpush.msra.mxu0 %v321
    %551 = vmatpush.msra.mxu0 %v316
    %552 = vmatpush.msra.mxu0 %v311
    %553 = vmatpush.msra.mxu0 %v306
    %554 = vmatpush.msra.mxu0 %v301
    %555 = vmatmul.f32.gmra.mxu0 %v470
    %v556 = vpop.f32.mrf.mxu0
    %v557 = vadd.f32 %v537, %v556
    %558 = vdwg.mxu0
    %559 = vmatpush.msra.mxu0 0.0
    %560 = vmatpush.msra.mxu0 0.0
    %561 = vmatpush.msra.mxu0 %v446
    %562 = vmatpush.msra.mxu0 %v441
    %563 = vmatpush.msra.mxu0 %v436
    %564 = vmatpush.msra.mxu0 %v431
    %565 = vmatpush.msra.mxu0 %v426
    %566 = vmatpush.msra.mxu0 %v421
    %567 = vmatpush.msra.mxu0 %v416
    %568 = vmatpush.msra.mxu0 %v411
    %569 = vmatpush.msra.mxu0 %v406
    %570 = vmatpush.msra.mxu0 %v401
    %571 = vmatpush.msra.mxu0 %v396
    %572 = vmatpush.msra.mxu0 %v391
    %573 = vmatpush.msra.mxu0 %v386
    %574 = vmatpush.msra.mxu0 %v381
    %575 = vmatmul.f32.gmra.mxu0 %v477
    %v576 = vpop.f32.mrf.mxu0
    %v577 = vadd.f32 %v557, %v576
    %578 = vdwg.mxu0
    %579 = vmatpush.msra.mxu0 %v137
    %580 = vmatpush.msra.mxu0 %v132
    %581 = vmatpush.msra.mxu0 %v127
    %582 = vmatpush.msra.mxu0 %v122
    %583 = vmatpush.msra.mxu0 %v117
    %584 = vmatpush.msra.mxu0 %v112
    %585 = vmatpush.msra.mxu0 %v107
    %586 = vmatpush.msra.mxu0 %v102
    %587 = vmatpush.msra.mxu0 %v97
    %588 = vmatpush.msra.mxu0 %v92
    %589 = vmatpush.msra.mxu0 %v87
    %590 = vmatpush.msra.mxu0 %v82
    %591 = vmatpush.msra.mxu0 %v77
    %592 = vmatpush.msra.mxu0 %v72
    %593 = vmatpush.msra.mxu0 %v67
    %594 = vmatpush.msra.mxu0 %v62
    %595 = vmatmul.f32.gmra.mxu0 %v467
    %v596 = vpop.f32.mrf.mxu0
    %v597 = vadd.f32 %v453, %v596
    %598 = vdwg.mxu0
    %599 = vmatpush.msra.mxu0 %v217
    %600 = vmatpush.msra.mxu0 %v212
    %601 = vmatpush.msra.mxu0 %v207
    %602 = vmatpush.msra.mxu0 %v202
    %603 = vmatpush.msra.mxu0 %v197
    %604 = vmatpush.msra.mxu0 %v192
    %605 = vmatpush.msra.mxu0 %v187
    %606 = vmatpush.msra.mxu0 %v182
    %607 = vmatpush.msra.mxu0 %v177
    %608 = vmatpush.msra.mxu0 %v172
    %609 = vmatpush.msra.mxu0 %v167
    %610 = vmatpush.msra.mxu0 %v162
    %611 = vmatpush.msra.mxu0 %v157
    %612 = vmatpush.msra.mxu0 %v152
    %613 = vmatpush.msra.mxu0 %v147
    %614 = vmatpush.msra.mxu0 %v142
    %615 = vmatmul.f32.gmra.mxu0 %v468
    %v616 = vpop.f32.mrf.mxu0
    %v617 = vadd.f32 %v597, %v616
    %618 = vdwg.mxu0
    %619 = vmatpush.msra.mxu0 %v297
    %620 = vmatpush.msra.mxu0 %v292
    %621 = vmatpush.msra.mxu0 %v287
    %622 = vmatpush.msra.mxu0 %v282
    %623 = vmatpush.msra.mxu0 %v277
    %624 = vmatpush.msra.mxu0 %v272
    %625 = vmatpush.msra.mxu0 %v267
    %626 = vmatpush.msra.mxu0 %v262
    %627 = vmatpush.msra.mxu0 %v257
    %628 = vmatpush.msra.mxu0 %v252
    %629 = vmatpush.msra.mxu0 %v247
    %630 = vmatpush.msra.mxu0 %v242
    %631 = vmatpush.msra.mxu0 %v237
    %632 = vmatpush.msra.mxu0 %v232
    %633 = vmatpush.msra.mxu0 %v227
    %634 = vmatpush.msra.mxu0 %v222
    %635 = vmatmul.f32.gmra.mxu0 %v469
    %v636 = vpop.f32.mrf.mxu0
    %v637 = vadd.f32 %v617, %v636
    %638 = vdwg.mxu0
    %639 = vmatpush.msra.mxu0 %v377
    %640 = vmatpush.msra.mxu0 %v372
    %641 = vmatpush.msra.mxu0 %v367
    %642 = vmatpush.msra.mxu0 %v362
    %643 = vmatpush.msra.mxu0 %v357
    %644 = vmatpush.msra.mxu0 %v352
    %645 = vmatpush.msra.mxu0 %v347
    %646 = vmatpush.msra.mxu0 %v342
    %647 = vmatpush.msra.mxu0 %v337
    %648 = vmatpush.msra.mxu0 %v332
    %649 = vmatpush.msra.mxu0 %v327
    %650 = vmatpush.msra.mxu0 %v322
    %651 = vmatpush.msra.mxu0 %v317
    %652 = vmatpush.msra.mxu0 %v312
    %653 = vmatpush.msra.mxu0 %v307
    %654 = vmatpush.msra.mxu0 %v302
    %655 = vmatmul.f32.gmra.mxu0 %v470
    %v656 = vpop.f32.mrf.mxu0
    %v657 = vadd.f32 %v637, %v656
    %658 = vdwg.mxu0
    %659 = vmatpush.msra.mxu0 0.0
    %660 = vmatpush.msra.mxu0 0.0
    %661 = vmatpush.msra.mxu0 %v447
    %662 = vmatpush.msra.mxu0 %v442
    %663 = vmatpush.msra.mxu0 %v437
    %664 = vmatpush.msra.mxu0 %v432
    %665 = vmatpush.msra.mxu0 %v427
    %666 = vmatpush.msra.mxu0 %v422
    %667 = vmatpush.msra.mxu0 %v417
    %668 = vmatpush.msra.mxu0 %v412
    %669 = vmatpush.msra.mxu0 %v407
    %670 = vmatpush.msra.mxu0 %v402
    %671 = vmatpush.msra.mxu0 %v397
    %672 = vmatpush.msra.mxu0 %v392
    %673 = vmatpush.msra.mxu0 %v387
    %674 = vmatpush.msra.mxu0 %v382
    %675 = vmatmul.f32.gmra.mxu0 %v477
    %v676 = vpop.f32.mrf.mxu0
    %v677 = vadd.f32 %v657, %v676
    %678 = vdwg.mxu0
    %679 = vmatpush.msra.mxu0 %v138
    %680 = vmatpush.msra.mxu0 %v133
    %681 = vmatpush.msra.mxu0 %v128
    %682 = vmatpush.msra.mxu0 %v123
    %683 = vmatpush.msra.mxu0 %v118
    %684 = vmatpush.msra.mxu0 %v113
    %685 = vmatpush.msra.mxu0 %v108
    %686 = vmatpush.msra.mxu0 %v103
    %687 = vmatpush.msra.mxu0 %v98
    %688 = vmatpush.msra.mxu0 %v93
    %689 = vmatpush.msra.mxu0 %v88
    %690 = vmatpush.msra.mxu0 %v83
    %691 = vmatpush.msra.mxu0 %v78
    %692 = vmatpush.msra.mxu0 %v73
    %693 = vmatpush.msra.mxu0 %v68
    %694 = vmatpush.msra.mxu0 %v63
    %695 = vmatmul.f32.gmra.mxu0 %v467
    %v696 = vpop.f32.mrf.mxu0
    %v697 = vadd.f32 %v454, %v696
    %698 = vdwg.mxu0
    %699 = vmatpush.msra.mxu0 %v218
    %700 = vmatpush.msra.mxu0 %v213
    %701 = vmatpush.msra.mxu0 %v208
    %702 = vmatpush.msra.mxu0 %v203
    %703 = vmatpush.msra.mxu0 %v198
    %704 = vmatpush.msra.mxu0 %v193
    %705 = vmatpush.msra.mxu0 %v188
    %706 = vmatpush.msra.mxu0 %v183
    %707 = vmatpush.msra.mxu0 %v178
    %708 = vmatpush.msra.mxu0 %v173
    %709 = vmatpush.msra.mxu0 %v168
    %710 = vmatpush.msra.mxu0 %v163
    %711 = vmatpush.msra.mxu0 %v158
    %712 = vmatpush.msra.mxu0 %v153
    %713 = vmatpush.msra.mxu0 %v148
    %714 = vmatpush.msra.mxu0 %v143
    %715 = vmatmul.f32.gmra.mxu0 %v468
    %v716 = vpop.f32.mrf.mxu0
    %v717 = vadd.f32 %v697, %v716
    %718 = vdwg.mxu0
    %719 = vmatpush.msra.mxu0 %v298
    %720 = vmatpush.msra.mxu0 %v293
    %721 = vmatpush.msra.mxu0 %v288
    %722 = vmatpush.msra.mxu0 %v283
    %723 = vmatpush.msra.mxu0 %v278
    %724 = vmatpush.msra.mxu0 %v273
    %725 = vmatpush.msra.mxu0 %v268
    %726 = vmatpush.msra.mxu0 %v263
    %727 = vmatpush.msra.mxu0 %v258
    %728 = vmatpush.msra.mxu0 %v253
    %729 = vmatpush.msra.mxu0 %v248
    %730 = vmatpush.msra.mxu0 %v243
    %731 = vmatpush.msra.mxu0 %v238
    %732 = vmatpush.msra.mxu0 %v233
    %733 = vmatpush.msra.mxu0 %v228
    %734 = vmatpush.msra.mxu0 %v223
    %735 = vmatmul.f32.gmra.mxu0 %v469
    %v736 = vpop.f32.mrf.mxu0
    %v737 = vadd.f32 %v717, %v736
    %738 = vdwg.mxu0
    %739 = vmatpush.msra.mxu0 %v378
    %740 = vmatpush.msra.mxu0 %v373
    %741 = vmatpush.msra.mxu0 %v368
    %742 = vmatpush.msra.mxu0 %v363
    %743 = vmatpush.msra.mxu0 %v358
    %744 = vmatpush.msra.mxu0 %v353
    %745 = vmatpush.msra.mxu0 %v348
    %746 = vmatpush.msra.mxu0 %v343
    %747 = vmatpush.msra.mxu0 %v338
    %748 = vmatpush.msra.mxu0 %v333
    %749 = vmatpush.msra.mxu0 %v328
    %750 = vmatpush.msra.mxu0 %v323
    %751 = vmatpush.msra.mxu0 %v318
    %752 = vmatpush.msra.mxu0 %v313
    %753 = vmatpush.msra.mxu0 %v308
    %754 = vmatpush.msra.mxu0 %v303
    %755 = vmatmul.f32.gmra.mxu0 %v470
    %v756 = vpop.f32.mrf.mxu0
    %v757 = vadd.f32 %v737, %v756
    %758 = vdwg.mxu0
    %759 = vmatpush.msra.mxu0 0.0
    %760 = vmatpush.msra.mxu0 0.0
    %761 = vmatpush.msra.mxu0 %v448
    %762 = vmatpush.msra.mxu0 %v443
    %763 = vmatpush.msra.mxu0 %v438
    %764 = vmatpush.msra.mxu0 %v433
    %765 = vmatpush.msra.mxu0 %v428
    %766 = vmatpush.msra.mxu0 %v423
    %767 = vmatpush.msra.mxu0 %v418
    %768 = vmatpush.msra.mxu0 %v413
    %769 = vmatpush.msra.mxu0 %v408
    %770 = vmatpush.msra.mxu0 %v403
    %771 = vmatpush.msra.mxu0 %v398
    %772 = vmatpush.msra.mxu0 %v393
    %773 = vmatpush.msra.mxu0 %v388
    %774 = vmatpush.msra.mxu0 %v383
    %775 = vmatmul.f32.gmra.mxu0 %v477
    %v776 = vpop.f32.mrf.mxu0
    %v777 = vadd.f32 %v757, %v776
    %778 = vdwg.mxu0
    %779 = vmatpush.msra.mxu0 %v139
    %780 = vmatpush.msra.mxu0 %v134
    %781 = vmatpush.msra.mxu0 %v129
    %782 = vmatpush.msra.mxu0 %v124
    %783 = vmatpush.msra.mxu0 %v119
    %784 = vmatpush.msra.mxu0 %v114
    %785 = vmatpush.msra.mxu0 %v109
    %786 = vmatpush.msra.mxu0 %v104
    %787 = vmatpush.msra.mxu0 %v99
    %788 = vmatpush.msra.mxu0 %v94
    %789 = vmatpush.msra.mxu0 %v89
    %790 = vmatpush.msra.mxu0 %v84
    %791 = vmatpush.msra.mxu0 %v79
    %792 = vmatpush.msra.mxu0 %v74
    %793 = vmatpush.msra.mxu0 %v69
    %794 = vmatpush.msra.mxu0 %v64
    %795 = vmatmul.f32.gmra.mxu0 %v467
    %v796 = vpop.f32.mrf.mxu0
    %v797 = vadd.f32 %v455, %v796
    %798 = vdwg.mxu0
    %799 = vmatpush.msra.mxu0 %v219
    %800 = vmatpush.msra.mxu0 %v214
    %801 = vmatpush.msra.mxu0 %v209
    %802 = vmatpush.msra.mxu0 %v204
    %803 = vmatpush.msra.mxu0 %v199
    %804 = vmatpush.msra.mxu0 %v194
    %805 = vmatpush.msra.mxu0 %v189
    %806 = vmatpush.msra.mxu0 %v184
    %807 = vmatpush.msra.mxu0 %v179
    %808 = vmatpush.msra.mxu0 %v174
    %809 = vmatpush.msra.mxu0 %v169
    %810 = vmatpush.msra.mxu0 %v164
    %811 = vmatpush.msra.mxu0 %v159
    %812 = vmatpush.msra.mxu0 %v154
    %813 = vmatpush.msra.mxu0 %v149
    %814 = vmatpush.msra.mxu0 %v144
    %815 = vmatmul.f32.gmra.mxu0 %v468
    %v816 = vpop.f32.mrf.mxu0
    %v817 = vadd.f32 %v797, %v816
    %818 = vdwg.mxu0
    %819 = vmatpush.msra.mxu0 %v299
    %820 = vmatpush.msra.mxu0 %v294
    %821 = vmatpush.msra.mxu0 %v289
    %822 = vmatpush.msra.mxu0 %v284
    %823 = vmatpush.msra.mxu0 %v279
    %824 = vmatpush.msra.mxu0 %v274
    %825 = vmatpush.msra.mxu0 %v269
    %826 = vmatpush.msra.mxu0 %v264
    %827 = vmatpush.msra.mxu0 %v259
    %828 = vmatpush.msra.mxu0 %v254
    %829 = vmatpush.msra.mxu0 %v249
    %830 = vmatpush.msra.mxu0 %v244
    %831 = vmatpush.msra.mxu0 %v239
    %832 = vmatpush.msra.mxu0 %v234
    %833 = vmatpush.msra.mxu0 %v229
    %834 = vmatpush.msra.mxu0 %v224
    %835 = vmatmul.f32.gmra.mxu0 %v469
    %v836 = vpop.f32.mrf.mxu0
    %v837 = vadd.f32 %v817, %v836
    %838 = vdwg.mxu0
    %839 = vmatpush.msra.mxu0 %v379
    %840 = vmatpush.msra.mxu0 %v374
    %841 = vmatpush.msra.mxu0 %v369
    %842 = vmatpush.msra.mxu0 %v364
    %843 = vmatpush.msra.mxu0 %v359
    %844 = vmatpush.msra.mxu0 %v354
    %845 = vmatpush.msra.mxu0 %v349
    %846 = vmatpush.msra.mxu0 %v344
    %847 = vmatpush.msra.mxu0 %v339
    %848 = vmatpush.msra.mxu0 %v334
    %849 = vmatpush.msra.mxu0 %v329
    %850 = vmatpush.msra.mxu0 %v324
    %851 = vmatpush.msra.mxu0 %v319
    %852 = vmatpush.msra.mxu0 %v314
    %853 = vmatpush.msra.mxu0 %v309
    %854 = vmatpush.msra.mxu0 %v304
    %855 = vmatmul.f32.gmra.mxu0 %v470
    %v856 = vpop.f32.mrf.mxu0
    %v857 = vadd.f32 %v837, %v856
    %858 = vdwg.mxu0
    %859 = vmatpush.msra.mxu0 0.0
    %860 = vmatpush.msra.mxu0 0.0
    %861 = vmatpush.msra.mxu0 %v449
    %862 = vmatpush.msra.mxu0 %v444
    %863 = vmatpush.msra.mxu0 %v439
    %864 = vmatpush.msra.mxu0 %v434
    %865 = vmatpush.msra.mxu0 %v429
    %866 = vmatpush.msra.mxu0 %v424
    %867 = vmatpush.msra.mxu0 %v419
    %868 = vmatpush.msra.mxu0 %v414
    %869 = vmatpush.msra.mxu0 %v409
    %870 = vmatpush.msra.mxu0 %v404
    %871 = vmatpush.msra.mxu0 %v399
    %872 = vmatpush.msra.mxu0 %v394
    %873 = vmatpush.msra.mxu0 %v389
    %874 = vmatpush.msra.mxu0 %v384
    %875 = vmatmul.f32.gmra.mxu0 %v477
    %v876 = vpop.f32.mrf.mxu0
    %v877 = vadd.f32 %v857, %v876
    %878 = vdwg.mxu0
    %879 = vmatpush.msra.mxu0 %v140
    %880 = vmatpush.msra.mxu0 %v135
    %881 = vmatpush.msra.mxu0 %v130
    %882 = vmatpush.msra.mxu0 %v125
    %883 = vmatpush.msra.mxu0 %v120
    %884 = vmatpush.msra.mxu0 %v115
    %885 = vmatpush.msra.mxu0 %v110
    %886 = vmatpush.msra.mxu0 %v105
    %887 = vmatpush.msra.mxu0 %v100
    %888 = vmatpush.msra.mxu0 %v95
    %889 = vmatpush.msra.mxu0 %v90
    %890 = vmatpush.msra.mxu0 %v85
    %891 = vmatpush.msra.mxu0 %v80
    %892 = vmatpush.msra.mxu0 %v75
    %893 = vmatpush.msra.mxu0 %v70
    %894 = vmatpush.msra.mxu0 %v65
    %895 = vmatmul.f32.gmra.mxu0 %v467
    %v896 = vpop.f32.mrf.mxu0
    %v897 = vadd.f32 %v456, %v896
    %898 = vdwg.mxu0
    %899 = vmatpush.msra.mxu0 %v220
    %900 = vmatpush.msra.mxu0 %v215
    %901 = vmatpush.msra.mxu0 %v210
    %902 = vmatpush.msra.mxu0 %v205
    %903 = vmatpush.msra.mxu0 %v200
    %904 = vmatpush.msra.mxu0 %v195
    %905 = vmatpush.msra.mxu0 %v190
    %906 = vmatpush.msra.mxu0 %v185
    %907 = vmatpush.msra.mxu0 %v180
    %908 = vmatpush.msra.mxu0 %v175
    %909 = vmatpush.msra.mxu0 %v170
    %910 = vmatpush.msra.mxu0 %v165
    %911 = vmatpush.msra.mxu0 %v160
    %912 = vmatpush.msra.mxu0 %v155
    %913 = vmatpush.msra.mxu0 %v150
    %914 = vmatpush.msra.mxu0 %v145
    %915 = vmatmul.f32.gmra.mxu0 %v468
    %v916 = vpop.f32.mrf.mxu0
    %v917 = vadd.f32 %v897, %v916
    %918 = vdwg.mxu0
    %919 = vmatpush.msra.mxu0 %v300
    %920 = vmatpush.msra.mxu0 %v295
    %921 = vmatpush.msra.mxu0 %v290
    %922 = vmatpush.msra.mxu0 %v285
    %923 = vmatpush.msra.mxu0 %v280
    %924 = vmatpush.msra.mxu0 %v275
    %925 = vmatpush.msra.mxu0 %v270
    %926 = vmatpush.msra.mxu0 %v265
    %927 = vmatpush.msra.mxu0 %v260
    %928 = vmatpush.msra.mxu0 %v255
    %929 = vmatpush.msra.mxu0 %v250
    %930 = vmatpush.msra.mxu0 %v245
    %931 = vmatpush.msra.mxu0 %v240
    %932 = vmatpush.msra.mxu0 %v235
    %933 = vmatpush.msra.mxu0 %v230
    %934 = vmatpush.msra.mxu0 %v225
    %935 = vmatmul.f32.gmra.mxu0 %v469
    %v936 = vpop.f32.mrf.mxu0
    %v937 = vadd.f32 %v917, %v936
    %938 = vdwg.mxu0
    %939 = vmatpush.msra.mxu0 %v380
    %940 = vmatpush.msra.mxu0 %v375
    %941 = vmatpush.msra.mxu0 %v370
    %942 = vmatpush.msra.mxu0 %v365
    %943 = vmatpush.msra.mxu0 %v360
    %944 = vmatpush.msra.mxu0 %v355
    %945 = vmatpush.msra.mxu0 %v350
    %946 = vmatpush.msra.mxu0 %v345
    %947 = vmatpush.msra.mxu0 %v340
    %948 = vmatpush.msra.mxu0 %v335
    %949 = vmatpush.msra.mxu0 %v330
    %950 = vmatpush.msra.mxu0 %v325
    %951 = vmatpush.msra.mxu0 %v320
    %952 = vmatpush.msra.mxu0 %v315
    %953 = vmatpush.msra.mxu0 %v310
    %954 = vmatpush.msra.mxu0 %v305
    %955 = vmatmul.f32.gmra.mxu0 %v470
    %v956 = vpop.f32.mrf.mxu0
    %v957 = vadd.f32 %v937, %v956
    %958 = vdwg.mxu0
    %959 = vmatpush.msra.mxu0 0.0
    %960 = vmatpush.msra.mxu0 0.0
    %961 = vmatpush.msra.mxu0 %v450
    %962 = vmatpush.msra.mxu0 %v445
    %963 = vmatpush.msra.mxu0 %v440
    %964 = vmatpush.msra.mxu0 %v435
    %965 = vmatpush.msra.mxu0 %v430
    %966 = vmatpush.msra.mxu0 %v425
    %967 = vmatpush.msra.mxu0 %v420
    %968 = vmatpush.msra.mxu0 %v415
    %969 = vmatpush.msra.mxu0 %v410
    %970 = vmatpush.msra.mxu0 %v405
    %971 = vmatpush.msra.mxu0 %v400
    %972 = vmatpush.msra.mxu0 %v395
    %973 = vmatpush.msra.mxu0 %v390
    %974 = vmatpush.msra.mxu0 %v385
    %975 = vmatmul.f32.gmra.mxu0 %v477
    %v976 = vpop.f32.mrf.mxu0
    %v977 = vadd.f32 %v957, %v976
    %978 = vdwg.mxu0
    %v979 = vld [vmem:[#allocation5] sm:$0xff]
    %v980 = vld [vmem:[#allocation5 + $0x8] sm:$0xff]
    %v981 = vld [vmem:[#allocation5 + $0x10] sm:$0xff]
    %v982 = vld [vmem:[#allocation5 + $0x18] sm:$0xff]
    %v983 = vld [vmem:[#allocation5 + $0x20] sm:$0xff]
    %v984 = vld [vmem:[#allocation5 + $0x28] sm:$0xff]
    %v985 = vld [vmem:[#allocation5 + $0x30] sm:$0xff]
    %v986 = vld [vmem:[#allocation5 + $0x38] sm:$0xff]
    %v987 = vld [vmem:[#allocation5 + $0x40] sm:$0xff]
    %v988 = vld [vmem:[#allocation5 + $0x48] sm:$0xff]
    %v989 = vld [vmem:[#allocation5 + $0x50] sm:$0xff]
    %v990 = vld [vmem:[#allocation5 + $0x58] sm:$0xff]
    %v991 = vld [vmem:[#allocation5 + $0x60] sm:$0xff]
    %v992 = vld [vmem:[#allocation5 + $0x68] sm:$0xff]
    %v993 = vld [vmem:[#allocation5 + $0x70] sm:$0xff]
    %v994 = vld [vmem:[#allocation5 + $0x78] sm:$0xff]
    %v995 = vld [vmem:[#allocation5 + $0x80] sm:$0xff]
    %v996 = vld [vmem:[#allocation5 + $0x88] sm:$0xff]
    %v997 = vld [vmem:[#allocation5 + $0x90] sm:$0xff]
    %v998 = vld [vmem:[#allocation5 + $0x98] sm:$0xff]
    %v999 = vld [vmem:[#allocation5 + $0xa0] sm:$0xff]
    %v1000 = vld [vmem:[#allocation5 + $0xa8] sm:$0xff]
    %v1001 = vld [vmem:[#allocation5 + $0xb0] sm:$0xff]
    %v1002 = vld [vmem:[#allocation5 + $0xb8] sm:$0xff]
    %v1003 = vld [vmem:[#allocation5 + $0xc0] sm:$0xff]
    %v1004 = vld [vmem:[#allocation5 + $0xc8] sm:$0xff]
    %v1005 = vld [vmem:[#allocation5 + $0xd0] sm:$0xff]
    %v1006 = vld [vmem:[#allocation5 + $0xd8] sm:$0xff]
    %v1007 = vld [vmem:[#allocation5 + $0xe0] sm:$0xff]
    %v1008 = vld [vmem:[#allocation5 + $0xe8] sm:$0xff]
    %v1009 = vld [vmem:[#allocation5 + $0xf0] sm:$0xff]
    %v1010 = vld [vmem:[#allocation5 + $0xf8] sm:$0xff]
    %v1011 = vld [vmem:[#allocation5 + $0x100] sm:$0xff]
    %v1012 = vld [vmem:[#allocation5 + $0x108] sm:$0xff]
    %v1013 = vld [vmem:[#allocation5 + $0x110] sm:$0xff]
    %v1014 = vld [vmem:[#allocation5 + $0x118] sm:$0xff]
    %v1015 = vld [vmem:[#allocation5 + $0x120] sm:$0xff]
    %v1016 = vld [vmem:[#allocation5 + $0x128] sm:$0xff]
    %v1017 = vld [vmem:[#allocation5 + $0x130] sm:$0xff]
    %v1018 = vld [vmem:[#allocation5 + $0x138] sm:$0xff]
    %v1019 = vld [vmem:[#allocation5 + $0x140] sm:$0xff]
    %v1020 = vld [vmem:[#allocation5 + $0x148] sm:$0xff]
    %v1021 = vld [vmem:[#allocation5 + $0x150] sm:$0xff]
    %v1022 = vld [vmem:[#allocation5 + $0x158] sm:$0xff]
    %v1023 = vld [vmem:[#allocation5 + $0x160] sm:$0xff]
    %v1024 = vld [vmem:[#allocation5 + $0x168] sm:$0xff]
    %v1025 = vld [vmem:[#allocation5 + $0x170] sm:$0xff]
    %v1026 = vld [vmem:[#allocation5 + $0x178] sm:$0xff]
    %v1027 = vld [vmem:[#allocation5 + $0x180] sm:$0xff]
    %v1028 = vld [vmem:[#allocation5 + $0x188] sm:$0xff]
    %v1029 = vld [vmem:[#allocation5 + $0x190] sm:$0xff]
    %v1030 = vld [vmem:[#allocation5 + $0x198] sm:$0xff]
    %v1031 = vld [vmem:[#allocation5 + $0x1a0] sm:$0xff]
    %v1032 = vld [vmem:[#allocation5 + $0x1a8] sm:$0xff]
    %v1033 = vld [vmem:[#allocation5 + $0x1b0] sm:$0xff]
    %v1034 = vld [vmem:[#allocation5 + $0x1b8] sm:$0xff]
    %v1035 = vld [vmem:[#allocation5 + $0x1c0] sm:$0xff]
    %v1036 = vld [vmem:[#allocation5 + $0x1c8] sm:$0xff]
    %v1037 = vld [vmem:[#allocation5 + $0x1d0] sm:$0xff]
    %v1038 = vld [vmem:[#allocation5 + $0x1d8] sm:$0xff]
    %v1039 = vld [vmem:[#allocation5 + $0x1e0] sm:$0xff]
    %v1040 = vld [vmem:[#allocation5 + $0x1e8] sm:$0xff]
    %v1041 = vld [vmem:[#allocation5 + $0x1f0] sm:$0xff]
    %v1042 = vld [vmem:[#allocation5 + $0x1f8] sm:$0xff]
    %v1043 = vld [vmem:[#allocation5 + $0x200] sm:$0xff]
    %v1044 = vld [vmem:[#allocation5 + $0x208] sm:$0xff]
    %v1045 = vld [vmem:[#allocation5 + $0x210] sm:$0xff]
    %v1046 = vld [vmem:[#allocation5 + $0x218] sm:$0xff]
    %v1047 = vld [vmem:[#allocation5 + $0x220] sm:$0xff]
    %v1048 = vld [vmem:[#allocation5 + $0x228] sm:$0xff]
    %v1049 = vld [vmem:[#allocation5 + $0x230] sm:$0xff]
    %v1050 = vld [vmem:[#allocation5 + $0x238] sm:$0xff]
    %v1051 = vld [vmem:[#allocation5 + $0x240] sm:$0xff]
    %v1052 = vld [vmem:[#allocation5 + $0x248] sm:$0xff]
    %v1053 = vld [vmem:[#allocation5 + $0x250] sm:$0xff]
    %v1054 = vld [vmem:[#allocation5 + $0x258] sm:$0xff]
    %v1055 = vld [vmem:[#allocation5 + $0x260] sm:$0xff]
    %v1056 = vld [vmem:[#allocation5 + $0x268] sm:$0xff]
    %v1057 = vld [vmem:[#allocation5 + $0x270] sm:$0xff]
    %v1058 = vld [vmem:[#allocation5 + $0x278] sm:$0xff]
    %v1059 = vld [vmem:[#allocation5 + $0x280] sm:$0xff]
    %v1060 = vld [vmem:[#allocation5 + $0x288] sm:$0xff]
    %v1061 = vld [vmem:[#allocation5 + $0x290] sm:$0xff]
    %v1062 = vld [vmem:[#allocation5 + $0x298] sm:$0xff]
    %v1063 = vld [vmem:[#allocation5 + $0x2a0] sm:$0xff]
    %v1064 = vld [vmem:[#allocation5 + $0x2a8] sm:$0xff]
    %v1065 = vld [vmem:[#allocation5 + $0x2b0] sm:$0xff]
    %v1066 = vld [vmem:[#allocation5 + $0x2b8] sm:$0xff]
    %v1067 = vld [vmem:[#allocation5 + $0x2c0] sm:$0xff]
    %v1068 = vld [vmem:[#allocation5 + $0x2c8] sm:$0xff]
    %v1069 = vld [vmem:[#allocation5 + $0x2d0] sm:$0xff]
    %v1070 = vld [vmem:[#allocation5 + $0x2d8] sm:$0xff]
    %v1071 = vld [vmem:[#allocation5 + $0x2e0] sm:$0xff]
    %v1072 = vld [vmem:[#allocation5 + $0x2e8] sm:$0xff]
    %v1073 = vld [vmem:[#allocation5 + $0x2f0] sm:$0xff]
    %v1074 = vld [vmem:[#allocation5 + $0x2f8] sm:$0xff]
    %v1075 = vld [vmem:[#allocation5 + $0x300] sm:$0xff]
    %v1076 = vld [vmem:[#allocation5 + $0x308] sm:$0xff]
    %v1077 = vld [vmem:[#allocation5 + $0x310] sm:$0xff]
    %v1078 = vld [vmem:[#allocation5 + $0x318] sm:$0xff]
    %v1079 = vld [vmem:[#allocation5 + $0x320] sm:$0xff]
    %v1080 = vld [vmem:[#allocation5 + $0x328] sm:$0xff]
    %v1081 = vld [vmem:[#allocation5 + $0x330] sm:$0xff]
    %v1082 = vld [vmem:[#allocation5 + $0x338] sm:$0xff]
    %v1083 = vld [vmem:[#allocation5 + $0x340] sm:$0xff]
    %v1084 = vld [vmem:[#allocation5 + $0x348] sm:$0xff]
    %v1085 = vld [vmem:[#allocation5 + $0x350] sm:$0xff]
    %v1086 = vld [vmem:[#allocation5 + $0x358] sm:$0xff]
    %v1087 = vld [vmem:[#allocation5 + $0x360] sm:$0xff]
    %v1088 = vld [vmem:[#allocation5 + $0x368] sm:$0xff]
    %v1089 = vld [vmem:[#allocation5 + $0x370] sm:$0xff]
    %v1090 = vld [vmem:[#allocation5 + $0x378] sm:$0xff]
    %v1091 = vld [vmem:[#allocation5 + $0x380] sm:$0xff]
    %v1092 = vld [vmem:[#allocation5 + $0x388] sm:$0xff]
    %v1093 = vld [vmem:[#allocation5 + $0x390] sm:$0xff]
    %v1094 = vld [vmem:[#allocation5 + $0x398] sm:$0xff]
    %v1095 = vld [vmem:[#allocation5 + $0x3a0] sm:$0xff]
    %v1096 = vld [vmem:[#allocation5 + $0x3a8] sm:$0xff]
    %v1097 = vld [vmem:[#allocation5 + $0x3b0] sm:$0xff]
    %v1098 = vld [vmem:[#allocation5 + $0x3b8] sm:$0xff]
    %v1099 = vld [vmem:[#allocation5 + $0x3c0] sm:$0xff]
    %v1100 = vld [vmem:[#allocation5 + $0x3c8] sm:$0xff]
    %v1101 = vld [vmem:[#allocation5 + $0x3d0] sm:$0xff]
    %v1102 = vld [vmem:[#allocation5 + $0x3d8] sm:$0xff]
    %v1103 = vld [vmem:[#allocation5 + $0x3e0] sm:$0xff]
    %v1104 = vld [vmem:[#allocation5 + $0x3e8] sm:$0xff]
    %v1105 = vld [vmem:[#allocation5 + $0x3f0] sm:$0xff]
    %v1106 = vld [vmem:[#allocation5 + $0x3f8] sm:$0xff]
    %v1107 = vld [vmem:[#allocation5 + $0x400] sm:$0xff]
    %v1108 = vld [vmem:[#allocation5 + $0x408] sm:$0xff]
    %v1109 = vld [vmem:[#allocation5 + $0x410] sm:$0xff]
    %v1110 = vld [vmem:[#allocation5 + $0x418] sm:$0xff]
    %v1111 = vld [vmem:[#allocation5 + $0x420] sm:$0xff]
    %v1112 = vld [vmem:[#allocation5 + $0x428] sm:$0xff]
    %v1113 = vld [vmem:[#allocation5 + $0x430] sm:$0xff]
    %v1114 = vld [vmem:[#allocation5 + $0x438] sm:$0xff]
    %v1115 = vld [vmem:[#allocation5 + $0x440] sm:$0xff]
    %v1116 = vld [vmem:[#allocation5 + $0x448] sm:$0xff]
    %v1117 = vld [vmem:[#allocation5 + $0x450] sm:$0xff]
    %v1118 = vld [vmem:[#allocation5 + $0x458] sm:$0xff]
    %v1119 = vld [vmem:[#allocation5 + $0x460] sm:$0xff]
    %v1120 = vld [vmem:[#allocation5 + $0x468] sm:$0xff]
    %v1121 = vld [vmem:[#allocation5 + $0x470] sm:$0xff]
    %v1122 = vld [vmem:[#allocation5 + $0x478] sm:$0xff]
    %v1123 = vld [vmem:[#allocation5 + $0x480] sm:$0xff]
    %v1124 = vld [vmem:[#allocation5 + $0x488] sm:$0xff]
    %v1125 = vld [vmem:[#allocation5 + $0x490] sm:$0xff]
    %v1126 = vld [vmem:[#allocation5 + $0x498] sm:$0xff]
    %v1127 = vld [vmem:[#allocation5 + $0x4a0] sm:$0xff]
    %v1128 = vld [vmem:[#allocation5 + $0x4a8] sm:$0xff]
    %v1129 = vld [vmem:[#allocation5 + $0x4b0] sm:$0xff]
    %v1130 = vld [vmem:[#allocation5 + $0x4b8] sm:$0xff]
    %v1131 = vld [vmem:[#allocation5 + $0x4c0] sm:$0xff]
    %v1132 = vld [vmem:[#allocation5 + $0x4c8] sm:$0xff]
    %v1133 = vld [vmem:[#allocation5 + $0x4d0] sm:$0xff]
    %v1134 = vld [vmem:[#allocation5 + $0x4d8] sm:$0xff]
    %v1135 = vld [vmem:[#allocation5 + $0x4e0] sm:$0xff]
    %v1136 = vld [vmem:[#allocation5 + $0x4e8] sm:$0xff]
    %v1137 = vld [vmem:[#allocation5 + $0x4f0] sm:$0xff]
    %v1138 = vld [vmem:[#allocation5 + $0x4f8] sm:$0xff]
    %v1139 = vld [vmem:[#allocation5 + $0x500] sm:$0xff]
    %v1140 = vld [vmem:[#allocation5 + $0x508] sm:$0xff]
    %v1141 = vld [vmem:[#allocation5 + $0x510] sm:$0xff]
    %v1142 = vld [vmem:[#allocation5 + $0x518] sm:$0xff]
    %v1143 = vld [vmem:[#allocation5 + $0x520] sm:$0xff]
    %v1144 = vld [vmem:[#allocation5 + $0x528] sm:$0xff]
    %v1145 = vld [vmem:[#allocation5 + $0x530] sm:$0xff]
    %v1146 = vld [vmem:[#allocation5 + $0x538] sm:$0xff]
    %v1147 = vld [vmem:[#allocation5 + $0x540] sm:$0xff]
    %v1148 = vld [vmem:[#allocation5 + $0x548] sm:$0xff]
    %v1149 = vld [vmem:[#allocation5 + $0x550] sm:$0xff]
    %v1150 = vld [vmem:[#allocation5 + $0x558] sm:$0xff]
    %v1151 = vld [vmem:[#allocation5 + $0x560] sm:$0xff]
    %v1152 = vld [vmem:[#allocation5 + $0x568] sm:$0xff]
    %v1153 = vld [vmem:[#allocation5 + $0x570] sm:$0xff]
    %v1154 = vld [vmem:[#allocation5 + $0x578] sm:$0xff]
    %v1155 = vld [vmem:[#allocation5 + $0x580] sm:$0xff]
    %v1156 = vld [vmem:[#allocation5 + $0x588] sm:$0xff]
    %v1157 = vld [vmem:[#allocation5 + $0x590] sm:$0xff]
    %v1158 = vld [vmem:[#allocation5 + $0x598] sm:$0xff]
    %v1159 = vld [vmem:[#allocation5 + $0x5a0] sm:$0xff]
    %v1160 = vld [vmem:[#allocation5 + $0x5a8] sm:$0xff]
    %v1161 = vld [vmem:[#allocation5 + $0x5b0] sm:$0xff]
    %v1162 = vld [vmem:[#allocation5 + $0x5b8] sm:$0xff]
    %v1163 = vld [vmem:[#allocation5 + $0x5c0] sm:$0xff]
    %v1164 = vld [vmem:[#allocation5 + $0x5c8] sm:$0xff]
    %v1165 = vld [vmem:[#allocation5 + $0x5d0] sm:$0xff]
    %v1166 = vld [vmem:[#allocation5 + $0x5d8] sm:$0xff]
    %v1167 = vld [vmem:[#allocation5 + $0x5e0] sm:$0xff]
    %v1168 = vld [vmem:[#allocation5 + $0x5e8] sm:$0xff]
    %v1169 = vld [vmem:[#allocation5 + $0x5f0] sm:$0xff]
    %v1170 = vld [vmem:[#allocation5 + $0x5f8] sm:$0xff]
    %v1171 = vld [vmem:[#allocation5 + $0x600] sm:$0xff]
    %v1172 = vld [vmem:[#allocation5 + $0x608] sm:$0xff]
    %v1173 = vld [vmem:[#allocation5 + $0x610] sm:$0xff]
    %v1174 = vld [vmem:[#allocation5 + $0x618] sm:$0xff]
    %v1175 = vld [vmem:[#allocation5 + $0x620] sm:$0xff]
    %v1176 = vld [vmem:[#allocation5 + $0x628] sm:$0xff]
    %v1177 = vld [vmem:[#allocation5 + $0x630] sm:$0xff]
    %v1178 = vld [vmem:[#allocation5 + $0x638] sm:$0xff]
    %v1179 = vld [vmem:[#allocation5 + $0x640] sm:$0xff]
    %v1180 = vld [vmem:[#allocation5 + $0x648] sm:$0xff]
    %v1181 = vld [vmem:[#allocation5 + $0x650] sm:$0xff]
    %v1182 = vld [vmem:[#allocation5 + $0x658] sm:$0xff]
    %v1183 = vld [vmem:[#allocation5 + $0x660] sm:$0xff]
    %v1184 = vld [vmem:[#allocation5 + $0x668] sm:$0xff]
    %v1185 = vld [vmem:[#allocation5 + $0x670] sm:$0xff]
    %v1186 = vld [vmem:[#allocation5 + $0x678] sm:$0xff]
    %v1187 = vld [vmem:[#allocation5 + $0x680] sm:$0xff]
    %v1188 = vld [vmem:[#allocation5 + $0x688] sm:$0xff]
    %v1189 = vld [vmem:[#allocation5 + $0x690] sm:$0xff]
    %v1190 = vld [vmem:[#allocation5 + $0x698] sm:$0xff]
    %v1191 = vld [vmem:[#allocation5 + $0x6a0] sm:$0xff]
    %v1192 = vld [vmem:[#allocation5 + $0x6a8] sm:$0xff]
    %v1193 = vld [vmem:[#allocation5 + $0x6b0] sm:$0xff]
    %v1194 = vld [vmem:[#allocation5 + $0x6b8] sm:$0xff]
    %v1195 = vld [vmem:[#allocation5 + $0x6c0] sm:$0xff]
    %v1196 = vld [vmem:[#allocation5 + $0x6c8] sm:$0xff]
    %v1197 = vld [vmem:[#allocation5 + $0x6d0] sm:$0xff]
    %v1198 = vld [vmem:[#allocation5 + $0x6d8] sm:$0xff]
    %v1199 = vld [vmem:[#allocation5 + $0x6e0] sm:$0xff]
    %v1200 = vld [vmem:[#allocation5 + $0x6e8] sm:$0xff]
    %v1201 = vld [vmem:[#allocation5 + $0x6f0] sm:$0xff]
    %v1202 = vld [vmem:[#allocation5 + $0x6f8] sm:$0xff]
    %v1203 = vld [vmem:[#allocation5 + $0x700] sm:$0xff]
    %v1204 = vld [vmem:[#allocation5 + $0x708] sm:$0xff]
    %v1205 = vld [vmem:[#allocation5 + $0x710] sm:$0xff]
    %v1206 = vld [vmem:[#allocation5 + $0x718] sm:$0xff]
    %v1207 = vld [vmem:[#allocation5 + $0x720] sm:$0xff]
    %v1208 = vld [vmem:[#allocation5 + $0x728] sm:$0xff]
    %v1209 = vld [vmem:[#allocation5 + $0x730] sm:$0xff]
    %v1210 = vld [vmem:[#allocation5 + $0x738] sm:$0xff]
    %v1211 = vld [vmem:[#allocation5 + $0x740] sm:$0xff]
    %v1212 = vld [vmem:[#allocation5 + $0x748] sm:$0xff]
    %v1213 = vld [vmem:[#allocation5 + $0x750] sm:$0xff]
    %v1214 = vld [vmem:[#allocation5 + $0x758] sm:$0xff]
    %v1215 = vld [vmem:[#allocation5 + $0x760] sm:$0xff]
    %v1216 = vld [vmem:[#allocation5 + $0x768] sm:$0xff]
    %v1217 = vld [vmem:[#allocation5 + $0x770] sm:$0xff]
    %v1218 = vld [vmem:[#allocation5 + $0x778] sm:$0xff]
    %v1219 = vld [vmem:[#allocation5 + $0x780] sm:$0xff]
    %v1220 = vld [vmem:[#allocation5 + $0x788] sm:$0xff]
    %v1221 = vld [vmem:[#allocation5 + $0x790] sm:$0xff]
    %v1222 = vld [vmem:[#allocation5 + $0x798] sm:$0xff]
    %v1223 = vld [vmem:[#allocation5 + $0x7a0] sm:$0xff]
    %v1224 = vld [vmem:[#allocation5 + $0x7a8] sm:$0xff]
    %v1225 = vld [vmem:[#allocation5 + $0x7b0] sm:$0xff]
    %v1226 = vld [vmem:[#allocation5 + $0x7b8] sm:$0xff]
    %v1227 = vld [vmem:[#allocation5 + $0x7c0] sm:$0xff]
    %v1228 = vld [vmem:[#allocation5 + $0x7c8] sm:$0xff]
    %v1229 = vld [vmem:[#allocation5 + $0x7d0] sm:$0xff]
    %v1230 = vld [vmem:[#allocation5 + $0x7d8] sm:$0xff]
    %v1231 = vld [vmem:[#allocation5 + $0x7e0] sm:$0xff]
    %v1232 = vld [vmem:[#allocation5 + $0x7e8] sm:$0xff]
    %v1233 = vld [vmem:[#allocation5 + $0x7f0] sm:$0xff]
    %v1234 = vld [vmem:[#allocation5 + $0x7f8] sm:$0xff]
    %v1235 = vld [vmem:[#allocation5 + $0x800] sm:$0xff]
    %v1236 = vld [vmem:[#allocation5 + $0x808] sm:$0xff]
    %v1237 = vld [vmem:[#allocation5 + $0x810] sm:$0xff]
    %v1238 = vld [vmem:[#allocation5 + $0x818] sm:$0xff]
    %v1239 = vld [vmem:[#allocation5 + $0x820] sm:$0xff]
    %v1240 = vld [vmem:[#allocation5 + $0x828] sm:$0xff]
    %v1241 = vld [vmem:[#allocation5 + $0x830] sm:$0xff]
    %v1242 = vld [vmem:[#allocation5 + $0x838] sm:$0xff]
    %v1243 = vld [vmem:[#allocation5 + $0x840] sm:$0xff]
    %v1244 = vld [vmem:[#allocation5 + $0x848] sm:$0xff]
    %v1245 = vld [vmem:[#allocation5 + $0x850] sm:$0xff]
    %v1246 = vld [vmem:[#allocation5 + $0x858] sm:$0xff]
    %v1247 = vld [vmem:[#allocation5 + $0x860] sm:$0xff]
    %v1248 = vld [vmem:[#allocation5 + $0x868] sm:$0xff]
    %v1249 = vld [vmem:[#allocation5 + $0x870] sm:$0xff]
    %v1250 = vld [vmem:[#allocation5 + $0x878] sm:$0xff]
    %v1251 = vld [vmem:[#allocation5 + $0x880] sm:$0xff]
    %v1252 = vld [vmem:[#allocation5 + $0x888] sm:$0xff]
    %v1253 = vld [vmem:[#allocation5 + $0x890] sm:$0xff]
    %v1254 = vld [vmem:[#allocation5 + $0x898] sm:$0xff]
    %v1255 = vld [vmem:[#allocation5 + $0x8a0] sm:$0xff]
    %v1256 = vld [vmem:[#allocation5 + $0x8a8] sm:$0xff]
    %v1257 = vld [vmem:[#allocation5 + $0x8b0] sm:$0xff]
    %v1258 = vld [vmem:[#allocation5 + $0x8b8] sm:$0xff]
    %v1259 = vld [vmem:[#allocation5 + $0x8c0] sm:$0xff]
    %v1260 = vld [vmem:[#allocation5 + $0x8c8] sm:$0xff]
    %v1261 = vld [vmem:[#allocation5 + $0x8d0] sm:$0xff]
    %v1262 = vld [vmem:[#allocation5 + $0x8d8] sm:$0xff]
    %v1263 = vld [vmem:[#allocation5 + $0x8e0] sm:$0xff]
    %v1264 = vld [vmem:[#allocation5 + $0x8e8] sm:$0xff]
    %v1265 = vld [vmem:[#allocation5 + $0x8f0] sm:$0xff]
    %v1266 = vld [vmem:[#allocation5 + $0x8f8] sm:$0xff]
    %v1267 = vld [vmem:[#allocation5 + $0x900] sm:$0xff]
    %v1268 = vld [vmem:[#allocation5 + $0x908] sm:$0xff]
    %v1269 = vld [vmem:[#allocation5 + $0x910] sm:$0xff]
    %v1270 = vld [vmem:[#allocation5 + $0x918] sm:$0xff]
    %v1271 = vld [vmem:[#allocation5 + $0x920] sm:$0xff]
    %v1272 = vld [vmem:[#allocation5 + $0x928] sm:$0xff]
    %v1273 = vld [vmem:[#allocation5 + $0x930] sm:$0xff]
    %v1274 = vld [vmem:[#allocation5 + $0x938] sm:$0xff]
    %v1275 = vld [vmem:[#allocation5 + $0x940] sm:$0xff]
    %v1276 = vld [vmem:[#allocation5 + $0x948] sm:$0xff]
    %v1277 = vld [vmem:[#allocation5 + $0x950] sm:$0xff]
    %v1278 = vld [vmem:[#allocation5 + $0x958] sm:$0xff]
    %v1279 = vld [vmem:[#allocation5 + $0x960] sm:$0xff]
    %v1280 = vld [vmem:[#allocation5 + $0x968] sm:$0xff]
    %v1281 = vld [vmem:[#allocation5 + $0x970] sm:$0xff]
    %v1282 = vld [vmem:[#allocation5 + $0x978] sm:$0xff]
    %v1283 = vld [vmem:[#allocation5 + $0x980] sm:$0xff]
    %v1284 = vld [vmem:[#allocation5 + $0x988] sm:$0xff]
    %v1285 = vld [vmem:[#allocation5 + $0x990] sm:$0xff]
    %v1286 = vld [vmem:[#allocation5 + $0x998] sm:$0xff]
    %v1287 = vld [vmem:[#allocation5 + $0x9a0] sm:$0xff]
    %v1288 = vld [vmem:[#allocation5 + $0x9a8] sm:$0xff]
    %v1289 = vld [vmem:[#allocation5 + $0x9b0] sm:$0xff]
    %v1290 = vld [vmem:[#allocation5 + $0x9b8] sm:$0xff]
    %v1291 = vld [vmem:[#allocation5 + $0x9c0] sm:$0xff]
    %v1292 = vld [vmem:[#allocation5 + $0x9c8] sm:$0xff]
    %v1293 = vld [vmem:[#allocation5 + $0x9d0] sm:$0xff]
    %v1294 = vld [vmem:[#allocation5 + $0x9d8] sm:$0xff]
    %v1295 = vld [vmem:[#allocation5 + $0x9e0] sm:$0xff]
    %v1296 = vld [vmem:[#allocation5 + $0x9e8] sm:$0xff]
    %v1297 = vld [vmem:[#allocation5 + $0x9f0] sm:$0xff]
    %v1298 = vld [vmem:[#allocation5 + $0x9f8] sm:$0xff]
    %v1299 = vld [vmem:[#allocation5 + $0xa00] sm:$0xff]
    %v1300 = vld [vmem:[#allocation5 + $0xa08] sm:$0xff]
    %v1301 = vld [vmem:[#allocation5 + $0xa10] sm:$0xff]
    %v1302 = vld [vmem:[#allocation5 + $0xa18] sm:$0xff]
    %v1303 = vld [vmem:[#allocation5 + $0xa20] sm:$0xff]
    %v1304 = vld [vmem:[#allocation5 + $0xa28] sm:$0xff]
    %v1305 = vld [vmem:[#allocation5 + $0xa30] sm:$0xff]
    %v1306 = vld [vmem:[#allocation5 + $0xa38] sm:$0xff]
    %v1307 = vld [vmem:[#allocation5 + $0xa40] sm:$0xff]
    %v1308 = vld [vmem:[#allocation5 + $0xa48] sm:$0xff]
    %v1309 = vld [vmem:[#allocation5 + $0xa50] sm:$0xff]
    %v1310 = vld [vmem:[#allocation5 + $0xa58] sm:$0xff]
    %v1311 = vld [vmem:[#allocation5 + $0xa60] sm:$0xff]
    %v1312 = vld [vmem:[#allocation5 + $0xa68] sm:$0xff]
    %v1313 = vld [vmem:[#allocation5 + $0xa70] sm:$0xff]
    %v1314 = vld [vmem:[#allocation5 + $0xa78] sm:$0xff]
    %v1315 = vld [vmem:[#allocation5 + $0xa80] sm:$0xff]
    %v1316 = vld [vmem:[#allocation5 + $0xa88] sm:$0xff]
    %v1317 = vld [vmem:[#allocation5 + $0xa90] sm:$0xff]
    %v1318 = vld [vmem:[#allocation5 + $0xa98] sm:$0xff]
    %v1319 = vld [vmem:[#allocation5 + $0xaa0] sm:$0xff]
    %v1320 = vld [vmem:[#allocation5 + $0xaa8] sm:$0xff]
    %v1321 = vld [vmem:[#allocation5 + $0xab0] sm:$0xff]
    %v1322 = vld [vmem:[#allocation5 + $0xab8] sm:$0xff]
    %v1323 = vld [vmem:[#allocation5 + $0xac0] sm:$0xff]
    %v1324 = vld [vmem:[#allocation5 + $0xac8] sm:$0xff]
    %v1325 = vld [vmem:[#allocation5 + $0xad0] sm:$0xff]
    %v1326 = vld [vmem:[#allocation5 + $0xad8] sm:$0xff]
    %v1327 = vld [vmem:[#allocation5 + $0xae0] sm:$0xff]
    %v1328 = vld [vmem:[#allocation5 + $0xae8] sm:$0xff]
    %v1329 = vld [vmem:[#allocation5 + $0xaf0] sm:$0xff]
    %v1330 = vld [vmem:[#allocation5 + $0xaf8] sm:$0xff]
    %v1331 = vld [vmem:[#allocation5 + $0xb00] sm:$0xff]
    %v1332 = vld [vmem:[#allocation5 + $0xb08] sm:$0xff]
    %v1333 = vld [vmem:[#allocation5 + $0xb10] sm:$0xff]
    %v1334 = vld [vmem:[#allocation5 + $0xb18] sm:$0xff]
    %v1335 = vld [vmem:[#allocation5 + $0xb20] sm:$0xff]
    %v1336 = vld [vmem:[#allocation5 + $0xb28] sm:$0xff]
    %v1337 = vld [vmem:[#allocation5 + $0xb30] sm:$0xff]
    %v1338 = vld [vmem:[#allocation5 + $0xb38] sm:$0xff]
    %v1339 = vld [vmem:[#allocation5 + $0xb40] sm:$0xff]
    %v1340 = vld [vmem:[#allocation5 + $0xb48] sm:$0xff]
    %v1341 = vld [vmem:[#allocation5 + $0xb50] sm:$0xff]
    %v1342 = vld [vmem:[#allocation5 + $0xb58] sm:$0xff]
    %v1343 = vld [vmem:[#allocation5 + $0xb60] sm:$0xff]
    %v1344 = vld [vmem:[#allocation5 + $0xb68] sm:$0xff]
    %v1345 = vld [vmem:[#allocation5 + $0xb70] sm:$0xff]
    %v1346 = vld [vmem:[#allocation5 + $0xb78] sm:$0xff]
    %v1347 = vld [vmem:[#allocation5 + $0xb80] sm:$0xff]
    %v1348 = vld [vmem:[#allocation5 + $0xb88] sm:$0xff]
    %v1349 = vld [vmem:[#allocation5 + $0xb90] sm:$0xff]
    %v1350 = vld [vmem:[#allocation5 + $0xb98] sm:$0xff]
    %v1351 = vld [vmem:[#allocation5 + $0xba0] sm:$0xff]
    %v1352 = vld [vmem:[#allocation5 + $0xba8] sm:$0xff]
    %v1353 = vld [vmem:[#allocation5 + $0xbb0] sm:$0xff]
    %v1354 = vld [vmem:[#allocation5 + $0xbb8] sm:$0xff]
    %v1355 = vld [vmem:[#allocation5 + $0xbc0] sm:$0xff]
    %v1356 = vld [vmem:[#allocation5 + $0xbc8] sm:$0xff]
    %v1357 = vld [vmem:[#allocation5 + $0xbd0] sm:$0xff]
    %v1358 = vld [vmem:[#allocation5 + $0xbd8] sm:$0xff]
    %v1359 = vld [vmem:[#allocation5 + $0xbe0] sm:$0xff]
    %v1360 = vld [vmem:[#allocation5 + $0xbe8] sm:$0xff]
    %v1361 = vld [vmem:[#allocation5 + $0xbf0] sm:$0xff]
    %v1362 = vld [vmem:[#allocation5 + $0xbf8] sm:$0xff]
    %v1363 = vld [vmem:[#allocation5 + $0xc00] sm:$0xff]
    %v1364 = vld [vmem:[#allocation5 + $0xc08] sm:$0xff]
    %v1365 = vld [vmem:[#allocation5 + $0xc10] sm:$0xff]
    %v1366 = vld [vmem:[#allocation5 + $0xc18] sm:$0xff]
    %v1367 = vld [vmem:[#allocation5 + $0xc20] sm:$0xff]
    %v1368 = vld [vmem:[#allocation5 + $0xc28] sm:$0xff]
    %v1369 = vld [vmem:[#allocation5 + $0xc30] sm:$0xff]
    %v1370 = vld [vmem:[#allocation5 + $0xc38] sm:$0xff]
    %v1371 = vld [vmem:[#allocation5 + $0xc40] sm:$0xff]
    %v1372 = vld [vmem:[#allocation5 + $0xc48] sm:$0xff]
    %v1373 = vld [vmem:[#allocation5 + $0xc50] sm:$0xff]
    %v1374 = vld [vmem:[#allocation5 + $0xc58] sm:$0xff]
    %v1375 = vld [vmem:[#allocation5 + $0xc60] sm:$0xff]
    %v1376 = vld [vmem:[#allocation5 + $0xc68] sm:$0xff]
    %v1377 = vld [vmem:[#allocation5 + $0xc70] sm:$0xff]
    %v1378 = vld [vmem:[#allocation5 + $0xc78] sm:$0xff]
    %1379 = vmatpush.msra.mxu0 %v1054
    %1380 = vmatpush.msra.mxu0 %v1049
    %1381 = vmatpush.msra.mxu0 %v1044
    %1382 = vmatpush.msra.mxu0 %v1039
    %1383 = vmatpush.msra.mxu0 %v1034
    %1384 = vmatpush.msra.mxu0 %v1029
    %1385 = vmatpush.msra.mxu0 %v1024
    %1386 = vmatpush.msra.mxu0 %v1019
    %1387 = vmatpush.msra.mxu0 %v1014
    %1388 = vmatpush.msra.mxu0 %v1009
    %1389 = vmatpush.msra.mxu0 %v1004
    %1390 = vmatpush.msra.mxu0 %v999
    %1391 = vmatpush.msra.mxu0 %v994
    %1392 = vmatpush.msra.mxu0 %v989
    %1393 = vmatpush.msra.mxu0 %v984
    %1394 = vmatpush.msra.mxu0 %v979
    %1395 = vmatmul.f32.gmra.mxu0 %v577
    %v1396 = vpop.f32.mrf.mxu0
    %v1397 = vadd.f32 %v452, %v1396
    %1398 = vdwg.mxu0
    %1399 = vmatpush.msra.mxu0 %v1134
    %1400 = vmatpush.msra.mxu0 %v1129
    %1401 = vmatpush.msra.mxu0 %v1124
    %1402 = vmatpush.msra.mxu0 %v1119
    %1403 = vmatpush.msra.mxu0 %v1114
    %1404 = vmatpush.msra.mxu0 %v1109
    %1405 = vmatpush.msra.mxu0 %v1104
    %1406 = vmatpush.msra.mxu0 %v1099
    %1407 = vmatpush.msra.mxu0 %v1094
    %1408 = vmatpush.msra.mxu0 %v1089
    %1409 = vmatpush.msra.mxu0 %v1084
    %1410 = vmatpush.msra.mxu0 %v1079
    %1411 = vmatpush.msra.mxu0 %v1074
    %1412 = vmatpush.msra.mxu0 %v1069
    %1413 = vmatpush.msra.mxu0 %v1064
    %1414 = vmatpush.msra.mxu0 %v1059
    %1415 = vmatmul.f32.gmra.mxu0 %v677
    %v1416 = vpop.f32.mrf.mxu0
    %v1417 = vadd.f32 %v1397, %v1416
    %1418 = vdwg.mxu0
    %1419 = vmatpush.msra.mxu0 %v1214
    %1420 = vmatpush.msra.mxu0 %v1209
    %1421 = vmatpush.msra.mxu0 %v1204
    %1422 = vmatpush.msra.mxu0 %v1199
    %1423 = vmatpush.msra.mxu0 %v1194
    %1424 = vmatpush.msra.mxu0 %v1189
    %1425 = vmatpush.msra.mxu0 %v1184
    %1426 = vmatpush.msra.mxu0 %v1179
    %1427 = vmatpush.msra.mxu0 %v1174
    %1428 = vmatpush.msra.mxu0 %v1169
    %1429 = vmatpush.msra.mxu0 %v1164
    %1430 = vmatpush.msra.mxu0 %v1159
    %1431 = vmatpush.msra.mxu0 %v1154
    %1432 = vmatpush.msra.mxu0 %v1149
    %1433 = vmatpush.msra.mxu0 %v1144
    %1434 = vmatpush.msra.mxu0 %v1139
    %1435 = vmatmul.f32.gmra.mxu0 %v777
    %v1436 = vpop.f32.mrf.mxu0
    %v1437 = vadd.f32 %v1417, %v1436
    %1438 = vdwg.mxu0
    %1439 = vmatpush.msra.mxu0 %v1294
    %1440 = vmatpush.msra.mxu0 %v1289
    %1441 = vmatpush.msra.mxu0 %v1284
    %1442 = vmatpush.msra.mxu0 %v1279
    %1443 = vmatpush.msra.mxu0 %v1274
    %1444 = vmatpush.msra.mxu0 %v1269
    %1445 = vmatpush.msra.mxu0 %v1264
    %1446 = vmatpush.msra.mxu0 %v1259
    %1447 = vmatpush.msra.mxu0 %v1254
    %1448 = vmatpush.msra.mxu0 %v1249
    %1449 = vmatpush.msra.mxu0 %v1244
    %1450 = vmatpush.msra.mxu0 %v1239
    %1451 = vmatpush.msra.mxu0 %v1234
    %1452 = vmatpush.msra.mxu0 %v1229
    %1453 = vmatpush.msra.mxu0 %v1224
    %1454 = vmatpush.msra.mxu0 %v1219
    %1455 = vmatmul.f32.gmra.mxu0 %v877
    %v1456 = vpop.f32.mrf.mxu0
    %v1457 = vadd.f32 %v1437, %v1456
    %1458 = vdwg.mxu0
    %1459 = vmatpush.msra.mxu0 %v1374
    %1460 = vmatpush.msra.mxu0 %v1369
    %1461 = vmatpush.msra.mxu0 %v1364
    %1462 = vmatpush.msra.mxu0 %v1359
    %1463 = vmatpush.msra.mxu0 %v1354
    %1464 = vmatpush.msra.mxu0 %v1349
    %1465 = vmatpush.msra.mxu0 %v1344
    %1466 = vmatpush.msra.mxu0 %v1339
    %1467 = vmatpush.msra.mxu0 %v1334
    %1468 = vmatpush.msra.mxu0 %v1329
    %1469 = vmatpush.msra.mxu0 %v1324
    %1470 = vmatpush.msra.mxu0 %v1319
    %1471 = vmatpush.msra.mxu0 %v1314
    %1472 = vmatpush.msra.mxu0 %v1309
    %1473 = vmatpush.msra.mxu0 %v1304
    %1474 = vmatpush.msra.mxu0 %v1299
    %1475 = vmatmul.f32.gmra.mxu0 %v977
    %v1476 = vpop.f32.mrf.mxu0
    %v1477 = vadd.f32 %v1457, %v1476
    %1478 = vdwg.mxu0
    %1479 = vmatpush.msra.mxu0 %v1055
    %1480 = vmatpush.msra.mxu0 %v1050
    %1481 = vmatpush.msra.mxu0 %v1045
    %1482 = vmatpush.msra.mxu0 %v1040
    %1483 = vmatpush.msra.mxu0 %v1035
    %1484 = vmatpush.msra.mxu0 %v1030
    %1485 = vmatpush.msra.mxu0 %v1025
    %1486 = vmatpush.msra.mxu0 %v1020
    %1487 = vmatpush.msra.mxu0 %v1015
    %1488 = vmatpush.msra.mxu0 %v1010
    %1489 = vmatpush.msra.mxu0 %v1005
    %1490 = vmatpush.msra.mxu0 %v1000
    %1491 = vmatpush.msra.mxu0 %v995
    %1492 = vmatpush.msra.mxu0 %v990
    %1493 = vmatpush.msra.mxu0 %v985
    %1494 = vmatpush.msra.mxu0 %v980
    %1495 = vmatmul.f32.gmra.mxu0 %v577
    %v1496 = vpop.f32.mrf.mxu0
    %v1497 = vadd.f32 %v453, %v1496
    %1498 = vdwg.mxu0
    %1499 = vmatpush.msra.mxu0 %v1135
    %1500 = vmatpush.msra.mxu0 %v1130
    %1501 = vmatpush.msra.mxu0 %v1125
    %1502 = vmatpush.msra.mxu0 %v1120
    %1503 = vmatpush.msra.mxu0 %v1115
    %1504 = vmatpush.msra.mxu0 %v1110
    %1505 = vmatpush.msra.mxu0 %v1105
    %1506 = vmatpush.msra.mxu0 %v1100
    %1507 = vmatpush.msra.mxu0 %v1095
    %1508 = vmatpush.msra.mxu0 %v1090
    %1509 = vmatpush.msra.mxu0 %v1085
    %1510 = vmatpush.msra.mxu0 %v1080
    %1511 = vmatpush.msra.mxu0 %v1075
    %1512 = vmatpush.msra.mxu0 %v1070
    %1513 = vmatpush.msra.mxu0 %v1065
    %1514 = vmatpush.msra.mxu0 %v1060
    %1515 = vmatmul.f32.gmra.mxu0 %v677
    %v1516 = vpop.f32.mrf.mxu0
    %v1517 = vadd.f32 %v1497, %v1516
    %1518 = vdwg.mxu0
    %1519 = vmatpush.msra.mxu0 %v1215
    %1520 = vmatpush.msra.mxu0 %v1210
    %1521 = vmatpush.msra.mxu0 %v1205
    %1522 = vmatpush.msra.mxu0 %v1200
    %1523 = vmatpush.msra.mxu0 %v1195
    %1524 = vmatpush.msra.mxu0 %v1190
    %1525 = vmatpush.msra.mxu0 %v1185
    %1526 = vmatpush.msra.mxu0 %v1180
    %1527 = vmatpush.msra.mxu0 %v1175
    %1528 = vmatpush.msra.mxu0 %v1170
    %1529 = vmatpush.msra.mxu0 %v1165
    %1530 = vmatpush.msra.mxu0 %v1160
    %1531 = vmatpush.msra.mxu0 %v1155
    %1532 = vmatpush.msra.mxu0 %v1150
    %1533 = vmatpush.msra.mxu0 %v1145
    %1534 = vmatpush.msra.mxu0 %v1140
    %1535 = vmatmul.f32.gmra.mxu0 %v777
    %v1536 = vpop.f32.mrf.mxu0
    %v1537 = vadd.f32 %v1517, %v1536
    %1538 = vdwg.mxu0
    %1539 = vmatpush.msra.mxu0 %v1295
    %1540 = vmatpush.msra.mxu0 %v1290
    %1541 = vmatpush.msra.mxu0 %v1285
    %1542 = vmatpush.msra.mxu0 %v1280
    %1543 = vmatpush.msra.mxu0 %v1275
    %1544 = vmatpush.msra.mxu0 %v1270
    %1545 = vmatpush.msra.mxu0 %v1265
    %1546 = vmatpush.msra.mxu0 %v1260
    %1547 = vmatpush.msra.mxu0 %v1255
    %1548 = vmatpush.msra.mxu0 %v1250
    %1549 = vmatpush.msra.mxu0 %v1245
    %1550 = vmatpush.msra.mxu0 %v1240
    %1551 = vmatpush.msra.mxu0 %v1235
    %1552 = vmatpush.msra.mxu0 %v1230
    %1553 = vmatpush.msra.mxu0 %v1225
    %1554 = vmatpush.msra.mxu0 %v1220
    %1555 = vmatmul.f32.gmra.mxu0 %v877
    %v1556 = vpop.f32.mrf.mxu0
    %v1557 = vadd.f32 %v1537, %v1556
    %1558 = vdwg.mxu0
    %1559 = vmatpush.msra.mxu0 %v1375
    %1560 = vmatpush.msra.mxu0 %v1370
    %1561 = vmatpush.msra.mxu0 %v1365
    %1562 = vmatpush.msra.mxu0 %v1360
    %1563 = vmatpush.msra.mxu0 %v1355
    %1564 = vmatpush.msra.mxu0 %v1350
    %1565 = vmatpush.msra.mxu0 %v1345
    %1566 = vmatpush.msra.mxu0 %v1340
    %1567 = vmatpush.msra.mxu0 %v1335
    %1568 = vmatpush.msra.mxu0 %v1330
    %1569 = vmatpush.msra.mxu0 %v1325
    %1570 = vmatpush.msra.mxu0 %v1320
    %1571 = vmatpush.msra.mxu0 %v1315
    %1572 = vmatpush.msra.mxu0 %v1310
    %1573 = vmatpush.msra.mxu0 %v1305
    %1574 = vmatpush.msra.mxu0 %v1300
    %1575 = vmatmul.f32.gmra.mxu0 %v977
    %v1576 = vpop.f32.mrf.mxu0
    %v1577 = vadd.f32 %v1557, %v1576
    %1578 = vdwg.mxu0
    %1579 = vmatpush.msra.mxu0 %v1056
    %1580 = vmatpush.msra.mxu0 %v1051
    %1581 = vmatpush.msra.mxu0 %v1046
    %1582 = vmatpush.msra.mxu0 %v1041
    %1583 = vmatpush.msra.mxu0 %v1036
    %1584 = vmatpush.msra.mxu0 %v1031
    %1585 = vmatpush.msra.mxu0 %v1026
    %1586 = vmatpush.msra.mxu0 %v1021
    %1587 = vmatpush.msra.mxu0 %v1016
    %1588 = vmatpush.msra.mxu0 %v1011
    %1589 = vmatpush.msra.mxu0 %v1006
    %1590 = vmatpush.msra.mxu0 %v1001
    %1591 = vmatpush.msra.mxu0 %v996
    %1592 = vmatpush.msra.mxu0 %v991
    %1593 = vmatpush.msra.mxu0 %v986
    %1594 = vmatpush.msra.mxu0 %v981
    %1595 = vmatmul.f32.gmra.mxu0 %v577
    %v1596 = vpop.f32.mrf.mxu0
    %v1597 = vadd.f32 %v454, %v1596
    %1598 = vdwg.mxu0
    %1599 = vmatpush.msra.mxu0 %v1136
    %1600 = vmatpush.msra.mxu0 %v1131
    %1601 = vmatpush.msra.mxu0 %v1126
    %1602 = vmatpush.msra.mxu0 %v1121
    %1603 = vmatpush.msra.mxu0 %v1116
    %1604 = vmatpush.msra.mxu0 %v1111
    %1605 = vmatpush.msra.mxu0 %v1106
    %1606 = vmatpush.msra.mxu0 %v1101
    %1607 = vmatpush.msra.mxu0 %v1096
    %1608 = vmatpush.msra.mxu0 %v1091
    %1609 = vmatpush.msra.mxu0 %v1086
    %1610 = vmatpush.msra.mxu0 %v1081
    %1611 = vmatpush.msra.mxu0 %v1076
    %1612 = vmatpush.msra.mxu0 %v1071
    %1613 = vmatpush.msra.mxu0 %v1066
    %1614 = vmatpush.msra.mxu0 %v1061
    %1615 = vmatmul.f32.gmra.mxu0 %v677
    %v1616 = vpop.f32.mrf.mxu0
    %v1617 = vadd.f32 %v1597, %v1616
    %1618 = vdwg.mxu0
    %1619 = vmatpush.msra.mxu0 %v1216
    %1620 = vmatpush.msra.mxu0 %v1211
    %1621 = vmatpush.msra.mxu0 %v1206
    %1622 = vmatpush.msra.mxu0 %v1201
    %1623 = vmatpush.msra.mxu0 %v1196
    %1624 = vmatpush.msra.mxu0 %v1191
    %1625 = vmatpush.msra.mxu0 %v1186
    %1626 = vmatpush.msra.mxu0 %v1181
    %1627 = vmatpush.msra.mxu0 %v1176
    %1628 = vmatpush.msra.mxu0 %v1171
    %1629 = vmatpush.msra.mxu0 %v1166
    %1630 = vmatpush.msra.mxu0 %v1161
    %1631 = vmatpush.msra.mxu0 %v1156
    %1632 = vmatpush.msra.mxu0 %v1151
    %1633 = vmatpush.msra.mxu0 %v1146
    %1634 = vmatpush.msra.mxu0 %v1141
    %1635 = vmatmul.f32.gmra.mxu0 %v777
    %v1636 = vpop.f32.mrf.mxu0
    %v1637 = vadd.f32 %v1617, %v1636
    %1638 = vdwg.mxu0
    %1639 = vmatpush.msra.mxu0 %v1296
    %1640 = vmatpush.msra.mxu0 %v1291
    %1641 = vmatpush.msra.mxu0 %v1286
    %1642 = vmatpush.msra.mxu0 %v1281
    %1643 = vmatpush.msra.mxu0 %v1276
    %1644 = vmatpush.msra.mxu0 %v1271
    %1645 = vmatpush.msra.mxu0 %v1266
    %1646 = vmatpush.msra.mxu0 %v1261
    %1647 = vmatpush.msra.mxu0 %v1256
    %1648 = vmatpush.msra.mxu0 %v1251
    %1649 = vmatpush.msra.mxu0 %v1246
    %1650 = vmatpush.msra.mxu0 %v1241
    %1651 = vmatpush.msra.mxu0 %v1236
    %1652 = vmatpush.msra.mxu0 %v1231
    %1653 = vmatpush.msra.mxu0 %v1226
    %1654 = vmatpush.msra.mxu0 %v1221
    %1655 = vmatmul.f32.gmra.mxu0 %v877
    %v1656 = vpop.f32.mrf.mxu0
    %v1657 = vadd.f32 %v1637, %v1656
    %1658 = vdwg.mxu0
    %1659 = vmatpush.msra.mxu0 %v1376
    %1660 = vmatpush.msra.mxu0 %v1371
    %1661 = vmatpush.msra.mxu0 %v1366
    %1662 = vmatpush.msra.mxu0 %v1361
    %1663 = vmatpush.msra.mxu0 %v1356
    %1664 = vmatpush.msra.mxu0 %v1351
    %1665 = vmatpush.msra.mxu0 %v1346
    %1666 = vmatpush.msra.mxu0 %v1341
    %1667 = vmatpush.msra.mxu0 %v1336
    %1668 = vmatpush.msra.mxu0 %v1331
    %1669 = vmatpush.msra.mxu0 %v1326
    %1670 = vmatpush.msra.mxu0 %v1321
    %1671 = vmatpush.msra.mxu0 %v1316
    %1672 = vmatpush.msra.mxu0 %v1311
    %1673 = vmatpush.msra.mxu0 %v1306
    %1674 = vmatpush.msra.mxu0 %v1301
    %1675 = vmatmul.f32.gmra.mxu0 %v977
    %v1676 = vpop.f32.mrf.mxu0
    %v1677 = vadd.f32 %v1657, %v1676
    %1678 = vdwg.mxu0
    %1679 = vmatpush.msra.mxu0 %v1057
    %1680 = vmatpush.msra.mxu0 %v1052
    %1681 = vmatpush.msra.mxu0 %v1047
    %1682 = vmatpush.msra.mxu0 %v1042
    %1683 = vmatpush.msra.mxu0 %v1037
    %1684 = vmatpush.msra.mxu0 %v1032
    %1685 = vmatpush.msra.mxu0 %v1027
    %1686 = vmatpush.msra.mxu0 %v1022
    %1687 = vmatpush.msra.mxu0 %v1017
    %1688 = vmatpush.msra.mxu0 %v1012
    %1689 = vmatpush.msra.mxu0 %v1007
    %1690 = vmatpush.msra.mxu0 %v1002
    %1691 = vmatpush.msra.mxu0 %v997
    %1692 = vmatpush.msra.mxu0 %v992
    %1693 = vmatpush.msra.mxu0 %v987
    %1694 = vmatpush.msra.mxu0 %v982
    %1695 = vmatmul.f32.gmra.mxu0 %v577
    %v1696 = vpop.f32.mrf.mxu0
    %v1697 = vadd.f32 %v455, %v1696
    %1698 = vdwg.mxu0
    %1699 = vmatpush.msra.mxu0 %v1137
    %1700 = vmatpush.msra.mxu0 %v1132
    %1701 = vmatpush.msra.mxu0 %v1127
    %1702 = vmatpush.msra.mxu0 %v1122
    %1703 = vmatpush.msra.mxu0 %v1117
    %1704 = vmatpush.msra.mxu0 %v1112
    %1705 = vmatpush.msra.mxu0 %v1107
    %1706 = vmatpush.msra.mxu0 %v1102
    %1707 = vmatpush.msra.mxu0 %v1097
    %1708 = vmatpush.msra.mxu0 %v1092
    %1709 = vmatpush.msra.mxu0 %v1087
    %1710 = vmatpush.msra.mxu0 %v1082
    %1711 = vmatpush.msra.mxu0 %v1077
    %1712 = vmatpush.msra.mxu0 %v1072
    %1713 = vmatpush.msra.mxu0 %v1067
    %1714 = vmatpush.msra.mxu0 %v1062
    %1715 = vmatmul.f32.gmra.mxu0 %v677
    %v1716 = vpop.f32.mrf.mxu0
    %v1717 = vadd.f32 %v1697, %v1716
    %1718 = vdwg.mxu0
    %1719 = vmatpush.msra.mxu0 %v1217
    %1720 = vmatpush.msra.mxu0 %v1212
    %1721 = vmatpush.msra.mxu0 %v1207
    %1722 = vmatpush.msra.mxu0 %v1202
    %1723 = vmatpush.msra.mxu0 %v1197
    %1724 = vmatpush.msra.mxu0 %v1192
    %1725 = vmatpush.msra.mxu0 %v1187
    %1726 = vmatpush.msra.mxu0 %v1182
    %1727 = vmatpush.msra.mxu0 %v1177
    %1728 = vmatpush.msra.mxu0 %v1172
    %1729 = vmatpush.msra.mxu0 %v1167
    %1730 = vmatpush.msra.mxu0 %v1162
    %1731 = vmatpush.msra.mxu0 %v1157
    %1732 = vmatpush.msra.mxu0 %v1152
    %1733 = vmatpush.msra.mxu0 %v1147
    %1734 = vmatpush.msra.mxu0 %v1142
    %1735 = vmatmul.f32.gmra.mxu0 %v777
    %v1736 = vpop.f32.mrf.mxu0
    %v1737 = vadd.f32 %v1717, %v1736
    %1738 = vdwg.mxu0
    %1739 = vmatpush.msra.mxu0 %v1297
    %1740 = vmatpush.msra.mxu0 %v1292
    %1741 = vmatpush.msra.mxu0 %v1287
    %1742 = vmatpush.msra.mxu0 %v1282
    %1743 = vmatpush.msra.mxu0 %v1277
    %1744 = vmatpush.msra.mxu0 %v1272
    %1745 = vmatpush.msra.mxu0 %v1267
    %1746 = vmatpush.msra.mxu0 %v1262
    %1747 = vmatpush.msra.mxu0 %v1257
    %1748 = vmatpush.msra.mxu0 %v1252
    %1749 = vmatpush.msra.mxu0 %v1247
    %1750 = vmatpush.msra.mxu0 %v1242
    %1751 = vmatpush.msra.mxu0 %v1237
    %1752 = vmatpush.msra.mxu0 %v1232
    %1753 = vmatpush.msra.mxu0 %v1227
    %1754 = vmatpush.msra.mxu0 %v1222
    %1755 = vmatmul.f32.gmra.mxu0 %v877
    %v1756 = vpop.f32.mrf.mxu0
    %v1757 = vadd.f32 %v1737, %v1756
    %1758 = vdwg.mxu0
    %1759 = vmatpush.msra.mxu0 %v1377
    %1760 = vmatpush.msra.mxu0 %v1372
    %1761 = vmatpush.msra.mxu0 %v1367
    %1762 = vmatpush.msra.mxu0 %v1362
    %1763 = vmatpush.msra.mxu0 %v1357
    %1764 = vmatpush.msra.mxu0 %v1352
    %1765 = vmatpush.msra.mxu0 %v1347
    %1766 = vmatpush.msra.mxu0 %v1342
    %1767 = vmatpush.msra.mxu0 %v1337
    %1768 = vmatpush.msra.mxu0 %v1332
    %1769 = vmatpush.msra.mxu0 %v1327
    %1770 = vmatpush.msra.mxu0 %v1322
    %1771 = vmatpush.msra.mxu0 %v1317
    %1772 = vmatpush.msra.mxu0 %v1312
    %1773 = vmatpush.msra.mxu0 %v1307
    %1774 = vmatpush.msra.mxu0 %v1302
    %1775 = vmatmul.f32.gmra.mxu0 %v977
    %v1776 = vpop.f32.mrf.mxu0
    %v1777 = vadd.f32 %v1757, %v1776
    %1778 = vdwg.mxu0
    %1779 = vmatpush.msra.mxu0 %v1058
    %1780 = vmatpush.msra.mxu0 %v1053
    %1781 = vmatpush.msra.mxu0 %v1048
    %1782 = vmatpush.msra.mxu0 %v1043
    %1783 = vmatpush.msra.mxu0 %v1038
    %1784 = vmatpush.msra.mxu0 %v1033
    %1785 = vmatpush.msra.mxu0 %v1028
    %1786 = vmatpush.msra.mxu0 %v1023
    %1787 = vmatpush.msra.mxu0 %v1018
    %1788 = vmatpush.msra.mxu0 %v1013
    %1789 = vmatpush.msra.mxu0 %v1008
    %1790 = vmatpush.msra.mxu0 %v1003
    %1791 = vmatpush.msra.mxu0 %v998
    %1792 = vmatpush.msra.mxu0 %v993
    %1793 = vmatpush.msra.mxu0 %v988
    %1794 = vmatpush.msra.mxu0 %v983
    %1795 = vmatmul.f32.gmra.mxu0 %v577
    %v1796 = vpop.f32.mrf.mxu0
    %v1797 = vadd.f32 %v456, %v1796
    %1798 = vdwg.mxu0
    %1799 = vmatpush.msra.mxu0 %v1138
    %1800 = vmatpush.msra.mxu0 %v1133
    %1801 = vmatpush.msra.mxu0 %v1128
    %1802 = vmatpush.msra.mxu0 %v1123
    %1803 = vmatpush.msra.mxu0 %v1118
    %1804 = vmatpush.msra.mxu0 %v1113
    %1805 = vmatpush.msra.mxu0 %v1108
    %1806 = vmatpush.msra.mxu0 %v1103
    %1807 = vmatpush.msra.mxu0 %v1098
    %1808 = vmatpush.msra.mxu0 %v1093
    %1809 = vmatpush.msra.mxu0 %v1088
    %1810 = vmatpush.msra.mxu0 %v1083
    %1811 = vmatpush.msra.mxu0 %v1078
    %1812 = vmatpush.msra.mxu0 %v1073
    %1813 = vmatpush.msra.mxu0 %v1068
    %1814 = vmatpush.msra.mxu0 %v1063
    %1815 = vmatmul.f32.gmra.mxu0 %v677
    %v1816 = vpop.f32.mrf.mxu0
    %v1817 = vadd.f32 %v1797, %v1816
    %1818 = vdwg.mxu0
    %1819 = vmatpush.msra.mxu0 %v1218
    %1820 = vmatpush.msra.mxu0 %v1213
    %1821 = vmatpush.msra.mxu0 %v1208
    %1822 = vmatpush.msra.mxu0 %v1203
    %1823 = vmatpush.msra.mxu0 %v1198
    %1824 = vmatpush.msra.mxu0 %v1193
    %1825 = vmatpush.msra.mxu0 %v1188
    %1826 = vmatpush.msra.mxu0 %v1183
    %1827 = vmatpush.msra.mxu0 %v1178
    %1828 = vmatpush.msra.mxu0 %v1173
    %1829 = vmatpush.msra.mxu0 %v1168
    %1830 = vmatpush.msra.mxu0 %v1163
    %1831 = vmatpush.msra.mxu0 %v1158
    %1832 = vmatpush.msra.mxu0 %v1153
    %1833 = vmatpush.msra.mxu0 %v1148
    %1834 = vmatpush.msra.mxu0 %v1143
    %1835 = vmatmul.f32.gmra.mxu0 %v777
    %v1836 = vpop.f32.mrf.mxu0
    %v1837 = vadd.f32 %v1817, %v1836
    %1838 = vdwg.mxu0
    %1839 = vmatpush.msra.mxu0 %v1298
    %1840 = vmatpush.msra.mxu0 %v1293
    %1841 = vmatpush.msra.mxu0 %v1288
    %1842 = vmatpush.msra.mxu0 %v1283
    %1843 = vmatpush.msra.mxu0 %v1278
    %1844 = vmatpush.msra.mxu0 %v1273
    %1845 = vmatpush.msra.mxu0 %v1268
    %1846 = vmatpush.msra.mxu0 %v1263
    %1847 = vmatpush.msra.mxu0 %v1258
    %1848 = vmatpush.msra.mxu0 %v1253
    %1849 = vmatpush.msra.mxu0 %v1248
    %1850 = vmatpush.msra.mxu0 %v1243
    %1851 = vmatpush.msra.mxu0 %v1238
    %1852 = vmatpush.msra.mxu0 %v1233
    %1853 = vmatpush.msra.mxu0 %v1228
    %1854 = vmatpush.msra.mxu0 %v1223
    %1855 = vmatmul.f32.gmra.mxu0 %v877
    %v1856 = vpop.f32.mrf.mxu0
    %v1857 = vadd.f32 %v1837, %v1856
    %1858 = vdwg.mxu0
    %1859 = vmatpush.msra.mxu0 %v1378
    %1860 = vmatpush.msra.mxu0 %v1373
    %1861 = vmatpush.msra.mxu0 %v1368
    %1862 = vmatpush.msra.mxu0 %v1363
    %1863 = vmatpush.msra.mxu0 %v1358
    %1864 = vmatpush.msra.mxu0 %v1353
    %1865 = vmatpush.msra.mxu0 %v1348
    %1866 = vmatpush.msra.mxu0 %v1343
    %1867 = vmatpush.msra.mxu0 %v1338
    %1868 = vmatpush.msra.mxu0 %v1333
    %1869 = vmatpush.msra.mxu0 %v1328
    %1870 = vmatpush.msra.mxu0 %v1323
    %1871 = vmatpush.msra.mxu0 %v1318
    %1872 = vmatpush.msra.mxu0 %v1313
    %1873 = vmatpush.msra.mxu0 %v1308
    %1874 = vmatpush.msra.mxu0 %v1303
    %1875 = vmatmul.f32.gmra.mxu0 %v977
    %v1876 = vpop.f32.mrf.mxu0
    %v1877 = vadd.f32 %v1857, %v1876
    %1878 = vdwg.mxu0
    %1879 = vmatpush.msra.mxu0 %v1054
    %1880 = vmatpush.msra.mxu0 %v1049
    %1881 = vmatpush.msra.mxu0 %v1044
    %1882 = vmatpush.msra.mxu0 %v1039
    %1883 = vmatpush.msra.mxu0 %v1034
    %1884 = vmatpush.msra.mxu0 %v1029
    %1885 = vmatpush.msra.mxu0 %v1024
    %1886 = vmatpush.msra.mxu0 %v1019
    %1887 = vmatpush.msra.mxu0 %v1014
    %1888 = vmatpush.msra.mxu0 %v1009
    %1889 = vmatpush.msra.mxu0 %v1004
    %1890 = vmatpush.msra.mxu0 %v999
    %1891 = vmatpush.msra.mxu0 %v994
    %1892 = vmatpush.msra.mxu0 %v989
    %1893 = vmatpush.msra.mxu0 %v984
    %1894 = vmatpush.msra.mxu0 %v979
    %1895 = vmatmul.f32.gmra.mxu0 %v1477
    %v1896 = vpop.f32.mrf.mxu0
    %v1897 = vadd.f32 %v452, %v1896
    %1898 = vdwg.mxu0
    %1899 = vmatpush.msra.mxu0 %v1134
    %1900 = vmatpush.msra.mxu0 %v1129
    %1901 = vmatpush.msra.mxu0 %v1124
    %1902 = vmatpush.msra.mxu0 %v1119
    %1903 = vmatpush.msra.mxu0 %v1114
    %1904 = vmatpush.msra.mxu0 %v1109
    %1905 = vmatpush.msra.mxu0 %v1104
    %1906 = vmatpush.msra.mxu0 %v1099
    %1907 = vmatpush.msra.mxu0 %v1094
    %1908 = vmatpush.msra.mxu0 %v1089
    %1909 = vmatpush.msra.mxu0 %v1084
    %1910 = vmatpush.msra.mxu0 %v1079
    %1911 = vmatpush.msra.mxu0 %v1074
    %1912 = vmatpush.msra.mxu0 %v1069
    %1913 = vmatpush.msra.mxu0 %v1064
    %1914 = vmatpush.msra.mxu0 %v1059
    %1915 = vmatmul.f32.gmra.mxu0 %v1577
    %v1916 = vpop.f32.mrf.mxu0
    %v1917 = vadd.f32 %v1897, %v1916
    %1918 = vdwg.mxu0
    %1919 = vmatpush.msra.mxu0 %v1214
    %1920 = vmatpush.msra.mxu0 %v1209
    %1921 = vmatpush.msra.mxu0 %v1204
    %1922 = vmatpush.msra.mxu0 %v1199
    %1923 = vmatpush.msra.mxu0 %v1194
    %1924 = vmatpush.msra.mxu0 %v1189
    %1925 = vmatpush.msra.mxu0 %v1184
    %1926 = vmatpush.msra.mxu0 %v1179
    %1927 = vmatpush.msra.mxu0 %v1174
    %1928 = vmatpush.msra.mxu0 %v1169
    %1929 = vmatpush.msra.mxu0 %v1164
    %1930 = vmatpush.msra.mxu0 %v1159
    %1931 = vmatpush.msra.mxu0 %v1154
    %1932 = vmatpush.msra.mxu0 %v1149
    %1933 = vmatpush.msra.mxu0 %v1144
    %1934 = vmatpush.msra.mxu0 %v1139
    %1935 = vmatmul.f32.gmra.mxu0 %v1677
    %v1936 = vpop.f32.mrf.mxu0
    %v1937 = vadd.f32 %v1917, %v1936
    %1938 = vdwg.mxu0
    %1939 = vmatpush.msra.mxu0 %v1294
    %1940 = vmatpush.msra.mxu0 %v1289
    %1941 = vmatpush.msra.mxu0 %v1284
    %1942 = vmatpush.msra.mxu0 %v1279
    %1943 = vmatpush.msra.mxu0 %v1274
    %1944 = vmatpush.msra.mxu0 %v1269
    %1945 = vmatpush.msra.mxu0 %v1264
    %1946 = vmatpush.msra.mxu0 %v1259
    %1947 = vmatpush.msra.mxu0 %v1254
    %1948 = vmatpush.msra.mxu0 %v1249
    %1949 = vmatpush.msra.mxu0 %v1244
    %1950 = vmatpush.msra.mxu0 %v1239
    %1951 = vmatpush.msra.mxu0 %v1234
    %1952 = vmatpush.msra.mxu0 %v1229
    %1953 = vmatpush.msra.mxu0 %v1224
    %1954 = vmatpush.msra.mxu0 %v1219
    %1955 = vmatmul.f32.gmra.mxu0 %v1777
    %v1956 = vpop.f32.mrf.mxu0
    %v1957 = vadd.f32 %v1937, %v1956
    %1958 = vdwg.mxu0
    %1959 = vmatpush.msra.mxu0 %v1374
    %1960 = vmatpush.msra.mxu0 %v1369
    %1961 = vmatpush.msra.mxu0 %v1364
    %1962 = vmatpush.msra.mxu0 %v1359
    %1963 = vmatpush.msra.mxu0 %v1354
    %1964 = vmatpush.msra.mxu0 %v1349
    %1965 = vmatpush.msra.mxu0 %v1344
    %1966 = vmatpush.msra.mxu0 %v1339
    %1967 = vmatpush.msra.mxu0 %v1334
    %1968 = vmatpush.msra.mxu0 %v1329
    %1969 = vmatpush.msra.mxu0 %v1324
    %1970 = vmatpush.msra.mxu0 %v1319
    %1971 = vmatpush.msra.mxu0 %v1314
    %1972 = vmatpush.msra.mxu0 %v1309
    %1973 = vmatpush.msra.mxu0 %v1304
    %1974 = vmatpush.msra.mxu0 %v1299
    %1975 = vmatmul.f32.gmra.mxu0 %v1877
    %v1976 = vpop.f32.mrf.mxu0
    %v1977 = vadd.f32 %v1957, %v1976
    %1978 = vdwg.mxu0
    %1979 = vmatpush.msra.mxu0 %v1055
    %1980 = vmatpush.msra.mxu0 %v1050
    %1981 = vmatpush.msra.mxu0 %v1045
    %1982 = vmatpush.msra.mxu0 %v1040
    %1983 = vmatpush.msra.mxu0 %v1035
    %1984 = vmatpush.msra.mxu0 %v1030
    %1985 = vmatpush.msra.mxu0 %v1025
    %1986 = vmatpush.msra.mxu0 %v1020
    %1987 = vmatpush.msra.mxu0 %v1015
    %1988 = vmatpush.msra.mxu0 %v1010
    %1989 = vmatpush.msra.mxu0 %v1005
    %1990 = vmatpush.msra.mxu0 %v1000
    %1991 = vmatpush.msra.mxu0 %v995
    %1992 = vmatpush.msra.mxu0 %v990
    %1993 = vmatpush.msra.mxu0 %v985
    %1994 = vmatpush.msra.mxu0 %v980
    %1995 = vmatmul.f32.gmra.mxu0 %v1477
    %v1996 = vpop.f32.mrf.mxu0
    %v1997 = vadd.f32 %v453, %v1996
    %1998 = vdwg.mxu0
    %1999 = vmatpush.msra.mxu0 %v1135
    %2000 = vmatpush.msra.mxu0 %v1130
    %2001 = vmatpush.msra.mxu0 %v1125
    %2002 = vmatpush.msra.mxu0 %v1120
    %2003 = vmatpush.msra.mxu0 %v1115
    %2004 = vmatpush.msra.mxu0 %v1110
    %2005 = vmatpush.msra.mxu0 %v1105
    %2006 = vmatpush.msra.mxu0 %v1100
    %2007 = vmatpush.msra.mxu0 %v1095
    %2008 = vmatpush.msra.mxu0 %v1090
    %2009 = vmatpush.msra.mxu0 %v1085
    %2010 = vmatpush.msra.mxu0 %v1080
    %2011 = vmatpush.msra.mxu0 %v1075
    %2012 = vmatpush.msra.mxu0 %v1070
    %2013 = vmatpush.msra.mxu0 %v1065
    %2014 = vmatpush.msra.mxu0 %v1060
    %2015 = vmatmul.f32.gmra.mxu0 %v1577
    %v2016 = vpop.f32.mrf.mxu0
    %v2017 = vadd.f32 %v1997, %v2016
    %2018 = vdwg.mxu0
    %2019 = vmatpush.msra.mxu0 %v1215
    %2020 = vmatpush.msra.mxu0 %v1210
    %2021 = vmatpush.msra.mxu0 %v1205
    %2022 = vmatpush.msra.mxu0 %v1200
    %2023 = vmatpush.msra.mxu0 %v1195
    %2024 = vmatpush.msra.mxu0 %v1190
    %2025 = vmatpush.msra.mxu0 %v1185
    %2026 = vmatpush.msra.mxu0 %v1180
    %2027 = vmatpush.msra.mxu0 %v1175
    %2028 = vmatpush.msra.mxu0 %v1170
    %2029 = vmatpush.msra.mxu0 %v1165
    %2030 = vmatpush.msra.mxu0 %v1160
    %2031 = vmatpush.msra.mxu0 %v1155
    %2032 = vmatpush.msra.mxu0 %v1150
    %2033 = vmatpush.msra.mxu0 %v1145
    %2034 = vmatpush.msra.mxu0 %v1140
    %2035 = vmatmul.f32.gmra.mxu0 %v1677
    %v2036 = vpop.f32.mrf.mxu0
    %v2037 = vadd.f32 %v2017, %v2036
    %2038 = vdwg.mxu0
    %2039 = vmatpush.msra.mxu0 %v1295
    %2040 = vmatpush.msra.mxu0 %v1290
    %2041 = vmatpush.msra.mxu0 %v1285
    %2042 = vmatpush.msra.mxu0 %v1280
    %2043 = vmatpush.msra.mxu0 %v1275
    %2044 = vmatpush.msra.mxu0 %v1270
    %2045 = vmatpush.msra.mxu0 %v1265
    %2046 = vmatpush.msra.mxu0 %v1260
    %2047 = vmatpush.msra.mxu0 %v1255
    %2048 = vmatpush.msra.mxu0 %v1250
    %2049 = vmatpush.msra.mxu0 %v1245
    %2050 = vmatpush.msra.mxu0 %v1240
    %2051 = vmatpush.msra.mxu0 %v1235
    %2052 = vmatpush.msra.mxu0 %v1230
    %2053 = vmatpush.msra.mxu0 %v1225
    %2054 = vmatpush.msra.mxu0 %v1220
    %2055 = vmatmul.f32.gmra.mxu0 %v1777
    %v2056 = vpop.f32.mrf.mxu0
    %v2057 = vadd.f32 %v2037, %v2056
    %2058 = vdwg.mxu0
    %2059 = vmatpush.msra.mxu0 %v1375
    %2060 = vmatpush.msra.mxu0 %v1370
    %2061 = vmatpush.msra.mxu0 %v1365
    %2062 = vmatpush.msra.mxu0 %v1360
    %2063 = vmatpush.msra.mxu0 %v1355
    %2064 = vmatpush.msra.mxu0 %v1350
    %2065 = vmatpush.msra.mxu0 %v1345
    %2066 = vmatpush.msra.mxu0 %v1340
    %2067 = vmatpush.msra.mxu0 %v1335
    %2068 = vmatpush.msra.mxu0 %v1330
    %2069 = vmatpush.msra.mxu0 %v1325
    %2070 = vmatpush.msra.mxu0 %v1320
    %2071 = vmatpush.msra.mxu0 %v1315
    %2072 = vmatpush.msra.mxu0 %v1310
    %2073 = vmatpush.msra.mxu0 %v1305
    %2074 = vmatpush.msra.mxu0 %v1300
    %2075 = vmatmul.f32.gmra.mxu0 %v1877
    %v2076 = vpop.f32.mrf.mxu0
    %v2077 = vadd.f32 %v2057, %v2076
    %2078 = vdwg.mxu0
    %2079 = vmatpush.msra.mxu0 %v1056
    %2080 = vmatpush.msra.mxu0 %v1051
    %2081 = vmatpush.msra.mxu0 %v1046
    %2082 = vmatpush.msra.mxu0 %v1041
    %2083 = vmatpush.msra.mxu0 %v1036
    %2084 = vmatpush.msra.mxu0 %v1031
    %2085 = vmatpush.msra.mxu0 %v1026
    %2086 = vmatpush.msra.mxu0 %v1021
    %2087 = vmatpush.msra.mxu0 %v1016
    %2088 = vmatpush.msra.mxu0 %v1011
    %2089 = vmatpush.msra.mxu0 %v1006
    %2090 = vmatpush.msra.mxu0 %v1001
    %2091 = vmatpush.msra.mxu0 %v996
    %2092 = vmatpush.msra.mxu0 %v991
    %2093 = vmatpush.msra.mxu0 %v986
    %2094 = vmatpush.msra.mxu0 %v981
    %2095 = vmatmul.f32.gmra.mxu0 %v1477
    %v2096 = vpop.f32.mrf.mxu0
    %v2097 = vadd.f32 %v454, %v2096
    %2098 = vdwg.mxu0
    %2099 = vmatpush.msra.mxu0 %v1136
    %2100 = vmatpush.msra.mxu0 %v1131
    %2101 = vmatpush.msra.mxu0 %v1126
    %2102 = vmatpush.msra.mxu0 %v1121
    %2103 = vmatpush.msra.mxu0 %v1116
    %2104 = vmatpush.msra.mxu0 %v1111
    %2105 = vmatpush.msra.mxu0 %v1106
    %2106 = vmatpush.msra.mxu0 %v1101
    %2107 = vmatpush.msra.mxu0 %v1096
    %2108 = vmatpush.msra.mxu0 %v1091
    %2109 = vmatpush.msra.mxu0 %v1086
    %2110 = vmatpush.msra.mxu0 %v1081
    %2111 = vmatpush.msra.mxu0 %v1076
    %2112 = vmatpush.msra.mxu0 %v1071
    %2113 = vmatpush.msra.mxu0 %v1066
    %2114 = vmatpush.msra.mxu0 %v1061
    %2115 = vmatmul.f32.gmra.mxu0 %v1577
    %v2116 = vpop.f32.mrf.mxu0
    %v2117 = vadd.f32 %v2097, %v2116
    %2118 = vdwg.mxu0
    %2119 = vmatpush.msra.mxu0 %v1216
    %2120 = vmatpush.msra.mxu0 %v1211
    %2121 = vmatpush.msra.mxu0 %v1206
    %2122 = vmatpush.msra.mxu0 %v1201
    %2123 = vmatpush.msra.mxu0 %v1196
    %2124 = vmatpush.msra.mxu0 %v1191
    %2125 = vmatpush.msra.mxu0 %v1186
    %2126 = vmatpush.msra.mxu0 %v1181
    %2127 = vmatpush.msra.mxu0 %v1176
    %2128 = vmatpush.msra.mxu0 %v1171
    %2129 = vmatpush.msra.mxu0 %v1166
    %2130 = vmatpush.msra.mxu0 %v1161
    %2131 = vmatpush.msra.mxu0 %v1156
    %2132 = vmatpush.msra.mxu0 %v1151
    %2133 = vmatpush.msra.mxu0 %v1146
    %2134 = vmatpush.msra.mxu0 %v1141
    %2135 = vmatmul.f32.gmra.mxu0 %v1677
    %v2136 = vpop.f32.mrf.mxu0
    %v2137 = vadd.f32 %v2117, %v2136
    %2138 = vdwg.mxu0
    %2139 = vmatpush.msra.mxu0 %v1296
    %2140 = vmatpush.msra.mxu0 %v1291
    %2141 = vmatpush.msra.mxu0 %v1286
    %2142 = vmatpush.msra.mxu0 %v1281
    %2143 = vmatpush.msra.mxu0 %v1276
    %2144 = vmatpush.msra.mxu0 %v1271
    %2145 = vmatpush.msra.mxu0 %v1266
    %2146 = vmatpush.msra.mxu0 %v1261
    %2147 = vmatpush.msra.mxu0 %v1256
    %2148 = vmatpush.msra.mxu0 %v1251
    %2149 = vmatpush.msra.mxu0 %v1246
    %2150 = vmatpush.msra.mxu0 %v1241
    %2151 = vmatpush.msra.mxu0 %v1236
    %2152 = vmatpush.msra.mxu0 %v1231
    %2153 = vmatpush.msra.mxu0 %v1226
    %2154 = vmatpush.msra.mxu0 %v1221
    %2155 = vmatmul.f32.gmra.mxu0 %v1777
    %v2156 = vpop.f32.mrf.mxu0
    %v2157 = vadd.f32 %v2137, %v2156
    %2158 = vdwg.mxu0
    %2159 = vmatpush.msra.mxu0 %v1376
    %2160 = vmatpush.msra.mxu0 %v1371
    %2161 = vmatpush.msra.mxu0 %v1366
    %2162 = vmatpush.msra.mxu0 %v1361
    %2163 = vmatpush.msra.mxu0 %v1356
    %2164 = vmatpush.msra.mxu0 %v1351
    %2165 = vmatpush.msra.mxu0 %v1346
    %2166 = vmatpush.msra.mxu0 %v1341
    %2167 = vmatpush.msra.mxu0 %v1336
    %2168 = vmatpush.msra.mxu0 %v1331
    %2169 = vmatpush.msra.mxu0 %v1326
    %2170 = vmatpush.msra.mxu0 %v1321
    %2171 = vmatpush.msra.mxu0 %v1316
    %2172 = vmatpush.msra.mxu0 %v1311
    %2173 = vmatpush.msra.mxu0 %v1306
    %2174 = vmatpush.msra.mxu0 %v1301
    %2175 = vmatmul.f32.gmra.mxu0 %v1877
    %v2176 = vpop.f32.mrf.mxu0
    %v2177 = vadd.f32 %v2157, %v2176
    %2178 = vdwg.mxu0
    %2179 = vmatpush.msra.mxu0 %v1057
    %2180 = vmatpush.msra.mxu0 %v1052
    %2181 = vmatpush.msra.mxu0 %v1047
    %2182 = vmatpush.msra.mxu0 %v1042
    %2183 = vmatpush.msra.mxu0 %v1037
    %2184 = vmatpush.msra.mxu0 %v1032
    %2185 = vmatpush.msra.mxu0 %v1027
    %2186 = vmatpush.msra.mxu0 %v1022
    %2187 = vmatpush.msra.mxu0 %v1017
    %2188 = vmatpush.msra.mxu0 %v1012
    %2189 = vmatpush.msra.mxu0 %v1007
    %2190 = vmatpush.msra.mxu0 %v1002
    %2191 = vmatpush.msra.mxu0 %v997
    %2192 = vmatpush.msra.mxu0 %v992
    %2193 = vmatpush.msra.mxu0 %v987
    %2194 = vmatpush.msra.mxu0 %v982
    %2195 = vmatmul.f32.gmra.mxu0 %v1477
    %v2196 = vpop.f32.mrf.mxu0
    %v2197 = vadd.f32 %v455, %v2196
    %2198 = vdwg.mxu0
    %2199 = vmatpush.msra.mxu0 %v1137
    %2200 = vmatpush.msra.mxu0 %v1132
    %2201 = vmatpush.msra.mxu0 %v1127
    %2202 = vmatpush.msra.mxu0 %v1122
    %2203 = vmatpush.msra.mxu0 %v1117
    %2204 = vmatpush.msra.mxu0 %v1112
    %2205 = vmatpush.msra.mxu0 %v1107
    %2206 = vmatpush.msra.mxu0 %v1102
    %2207 = vmatpush.msra.mxu0 %v1097
    %2208 = vmatpush.msra.mxu0 %v1092
    %2209 = vmatpush.msra.mxu0 %v1087
    %2210 = vmatpush.msra.mxu0 %v1082
    %2211 = vmatpush.msra.mxu0 %v1077
    %2212 = vmatpush.msra.mxu0 %v1072
    %2213 = vmatpush.msra.mxu0 %v1067
    %2214 = vmatpush.msra.mxu0 %v1062
    %2215 = vmatmul.f32.gmra.mxu0 %v1577
    %v2216 = vpop.f32.mrf.mxu0
    %v2217 = vadd.f32 %v2197, %v2216
    %2218 = vdwg.mxu0
    %2219 = vmatpush.msra.mxu0 %v1217
    %2220 = vmatpush.msra.mxu0 %v1212
    %2221 = vmatpush.msra.mxu0 %v1207
    %2222 = vmatpush.msra.mxu0 %v1202
    %2223 = vmatpush.msra.mxu0 %v1197
    %2224 = vmatpush.msra.mxu0 %v1192
    %2225 = vmatpush.msra.mxu0 %v1187
    %2226 = vmatpush.msra.mxu0 %v1182
    %2227 = vmatpush.msra.mxu0 %v1177
    %2228 = vmatpush.msra.mxu0 %v1172
    %2229 = vmatpush.msra.mxu0 %v1167
    %2230 = vmatpush.msra.mxu0 %v1162
    %2231 = vmatpush.msra.mxu0 %v1157
    %2232 = vmatpush.msra.mxu0 %v1152
    %2233 = vmatpush.msra.mxu0 %v1147
    %2234 = vmatpush.msra.mxu0 %v1142
    %2235 = vmatmul.f32.gmra.mxu0 %v1677
    %v2236 = vpop.f32.mrf.mxu0
    %v2237 = vadd.f32 %v2217, %v2236
    %2238 = vdwg.mxu0
    %2239 = vmatpush.msra.mxu0 %v1297
    %2240 = vmatpush.msra.mxu0 %v1292
    %2241 = vmatpush.msra.mxu0 %v1287
    %2242 = vmatpush.msra.mxu0 %v1282
    %2243 = vmatpush.msra.mxu0 %v1277
    %2244 = vmatpush.msra.mxu0 %v1272
    %2245 = vmatpush.msra.mxu0 %v1267
    %2246 = vmatpush.msra.mxu0 %v1262
    %2247 = vmatpush.msra.mxu0 %v1257
    %2248 = vmatpush.msra.mxu0 %v1252
    %2249 = vmatpush.msra.mxu0 %v1247
    %2250 = vmatpush.msra.mxu0 %v1242
    %2251 = vmatpush.msra.mxu0 %v1237
    %2252 = vmatpush.msra.mxu0 %v1232
    %2253 = vmatpush.msra.mxu0 %v1227
    %2254 = vmatpush.msra.mxu0 %v1222
    %2255 = vmatmul.f32.gmra.mxu0 %v1777
    %v2256 = vpop.f32.mrf.mxu0
    %v2257 = vadd.f32 %v2237, %v2256
    %2258 = vdwg.mxu0
    %2259 = vmatpush.msra.mxu0 %v1377
    %2260 = vmatpush.msra.mxu0 %v1372
    %2261 = vmatpush.msra.mxu0 %v1367
    %2262 = vmatpush.msra.mxu0 %v1362
    %2263 = vmatpush.msra.mxu0 %v1357
    %2264 = vmatpush.msra.mxu0 %v1352
    %2265 = vmatpush.msra.mxu0 %v1347
    %2266 = vmatpush.msra.mxu0 %v1342
    %2267 = vmatpush.msra.mxu0 %v1337
    %2268 = vmatpush.msra.mxu0 %v1332
    %2269 = vmatpush.msra.mxu0 %v1327
    %2270 = vmatpush.msra.mxu0 %v1322
    %2271 = vmatpush.msra.mxu0 %v1317
    %2272 = vmatpush.msra.mxu0 %v1312
    %2273 = vmatpush.msra.mxu0 %v1307
    %2274 = vmatpush.msra.mxu0 %v1302
    %2275 = vmatmul.f32.gmra.mxu0 %v1877
    %v2276 = vpop.f32.mrf.mxu0
    %v2277 = vadd.f32 %v2257, %v2276
    %2278 = vdwg.mxu0
    %2279 = vmatpush.msra.mxu0 %v1058
    %2280 = vmatpush.msra.mxu0 %v1053
    %2281 = vmatpush.msra.mxu0 %v1048
    %2282 = vmatpush.msra.mxu0 %v1043
    %2283 = vmatpush.msra.mxu0 %v1038
    %2284 = vmatpush.msra.mxu0 %v1033
    %2285 = vmatpush.msra.mxu0 %v1028
    %2286 = vmatpush.msra.mxu0 %v1023
    %2287 = vmatpush.msra.mxu0 %v1018
    %2288 = vmatpush.msra.mxu0 %v1013
    %2289 = vmatpush.msra.mxu0 %v1008
    %2290 = vmatpush.msra.mxu0 %v1003
    %2291 = vmatpush.msra.mxu0 %v998
    %2292 = vmatpush.msra.mxu0 %v993
    %2293 = vmatpush.msra.mxu0 %v988
    %2294 = vmatpush.msra.mxu0 %v983
    %2295 = vmatmul.f32.gmra.mxu0 %v1477
    %v2296 = vpop.f32.mrf.mxu0
    %v2297 = vadd.f32 %v456, %v2296
    %2298 = vdwg.mxu0
    %2299 = vmatpush.msra.mxu0 %v1138
    %2300 = vmatpush.msra.mxu0 %v1133
    %2301 = vmatpush.msra.mxu0 %v1128
    %2302 = vmatpush.msra.mxu0 %v1123
    %2303 = vmatpush.msra.mxu0 %v1118
    %2304 = vmatpush.msra.mxu0 %v1113
    %2305 = vmatpush.msra.mxu0 %v1108
    %2306 = vmatpush.msra.mxu0 %v1103
    %2307 = vmatpush.msra.mxu0 %v1098
    %2308 = vmatpush.msra.mxu0 %v1093
    %2309 = vmatpush.msra.mxu0 %v1088
    %2310 = vmatpush.msra.mxu0 %v1083
    %2311 = vmatpush.msra.mxu0 %v1078
    %2312 = vmatpush.msra.mxu0 %v1073
    %2313 = vmatpush.msra.mxu0 %v1068
    %2314 = vmatpush.msra.mxu0 %v1063
    %2315 = vmatmul.f32.gmra.mxu0 %v1577
    %v2316 = vpop.f32.mrf.mxu0
    %v2317 = vadd.f32 %v2297, %v2316
    %2318 = vdwg.mxu0
    %2319 = vmatpush.msra.mxu0 %v1218
    %2320 = vmatpush.msra.mxu0 %v1213
    %2321 = vmatpush.msra.mxu0 %v1208
    %2322 = vmatpush.msra.mxu0 %v1203
    %2323 = vmatpush.msra.mxu0 %v1198
    %2324 = vmatpush.msra.mxu0 %v1193
    %2325 = vmatpush.msra.mxu0 %v1188
    %2326 = vmatpush.msra.mxu0 %v1183
    %2327 = vmatpush.msra.mxu0 %v1178
    %2328 = vmatpush.msra.mxu0 %v1173
    %2329 = vmatpush.msra.mxu0 %v1168
    %2330 = vmatpush.msra.mxu0 %v1163
    %2331 = vmatpush.msra.mxu0 %v1158
    %2332 = vmatpush.msra.mxu0 %v1153
    %2333 = vmatpush.msra.mxu0 %v1148
    %2334 = vmatpush.msra.mxu0 %v1143
    %2335 = vmatmul.f32.gmra.mxu0 %v1677
    %v2336 = vpop.f32.mrf.mxu0
    %v2337 = vadd.f32 %v2317, %v2336
    %2338 = vdwg.mxu0
    %2339 = vmatpush.msra.mxu0 %v1298
    %2340 = vmatpush.msra.mxu0 %v1293
    %2341 = vmatpush.msra.mxu0 %v1288
    %2342 = vmatpush.msra.mxu0 %v1283
    %2343 = vmatpush.msra.mxu0 %v1278
    %2344 = vmatpush.msra.mxu0 %v1273
    %2345 = vmatpush.msra.mxu0 %v1268
    %2346 = vmatpush.msra.mxu0 %v1263
    %2347 = vmatpush.msra.mxu0 %v1258
    %2348 = vmatpush.msra.mxu0 %v1253
    %2349 = vmatpush.msra.mxu0 %v1248
    %2350 = vmatpush.msra.mxu0 %v1243
    %2351 = vmatpush.msra.mxu0 %v1238
    %2352 = vmatpush.msra.mxu0 %v1233
    %2353 = vmatpush.msra.mxu0 %v1228
    %2354 = vmatpush.msra.mxu0 %v1223
    %2355 = vmatmul.f32.gmra.mxu0 %v1777
    %v2356 = vpop.f32.mrf.mxu0
    %v2357 = vadd.f32 %v2337, %v2356
    %2358 = vdwg.mxu0
    %2359 = vmatpush.msra.mxu0 %v1378
    %2360 = vmatpush.msra.mxu0 %v1373
    %2361 = vmatpush.msra.mxu0 %v1368
    %2362 = vmatpush.msra.mxu0 %v1363
    %2363 = vmatpush.msra.mxu0 %v1358
    %2364 = vmatpush.msra.mxu0 %v1353
    %2365 = vmatpush.msra.mxu0 %v1348
    %2366 = vmatpush.msra.mxu0 %v1343
    %2367 = vmatpush.msra.mxu0 %v1338
    %2368 = vmatpush.msra.mxu0 %v1333
    %2369 = vmatpush.msra.mxu0 %v1328
    %2370 = vmatpush.msra.mxu0 %v1323
    %2371 = vmatpush.msra.mxu0 %v1318
    %2372 = vmatpush.msra.mxu0 %v1313
    %2373 = vmatpush.msra.mxu0 %v1308
    %2374 = vmatpush.msra.mxu0 %v1303
    %2375 = vmatmul.f32.gmra.mxu0 %v1877
    %v2376 = vpop.f32.mrf.mxu0
    %v2377 = vadd.f32 %v2357, %v2376
    %2378 = vdwg.mxu0
    %v2383 = vrot.slane %v2077, 6
    %v2384 = vrot.slane %v2177, 4
    %v2385 = vrot.slane %v2277, 2
    %vm2386 = vcmask 1041408
    %v2387 = vsel %vm2386, %v1977, %v2383
    %vm2388 = vcmask 1045508
    %v2389 = vsel %vm2388, %v2384, %v2385
    %vm2390 = vcmask 1043456
    %v2391 = vsel %vm2390, %v2387, %v2389
    %2393 = vst [vmem:[#allocation8] sm:$0xff] %v2391
    %vm2394 = vcmask 910336
    %2395 = vst.msk [vmem:[#allocation8 + $0x8] sm:$0x3] %vm2394, %v2377
    // Predicated region
    $region26: #{tpu_custom_call.1} parent=1 // pred_check
      _
    $region27: #{tpu_custom_call.1} parent=1 // pred_check_branch
      %2397 = sbr.rel (0) target = $region29
    $region28: #{tpu_custom_call.1} parent=1 // pred_region
      %2399 = vsyncadd [#allocation4], 0
      %s2401 = sshll.u32 [#allocation8], 4
      %s2402 = int_to_ptr.vmem [resolvable:$true] %s2401
      %s2403 = sshll.u32 %s3, 4
      %s2404 = int_to_ptr.hbm [resolvable:$true] %s2403
      %2406 = dma.vmem_to_hbm [thread:$0]  %s2402, 160, %s2404, [#allocation4]
    $region29: #{tpu_custom_call.1} parent=1 // pred_fallthru
      _
    // Predicated region
    $region30: #{tpu_custom_call.1} parent=1 // pred_check
      _
    $region31: #{tpu_custom_call.1} parent=1 // pred_check_branch
      %2408 = sbr.rel (0) target = $region33
    $region32: #{tpu_custom_call.1} parent=1 // pred_region
      %2410 = dma.done [#allocation4], 160
    $region33: #{tpu_custom_call.1} parent=1 // pred_fallthru
      _
    %2411 = vsyncpa [#allocation3], 1
    %2412 = vsyncpa [#allocation6], 1
    %2413 = vsyncpa [#allocation4], 1

</llo_original>
